<compile_context>
chip_gen: v7x
topology: tpu7x:2x2x1
jax: 0.10.0
libtpu: 0.0.40
codegen_flags: <defaults>
</compile_context>

<pallas_src>
import functools

import jax
import jax.numpy as jnp
from jax import lax
from jax.experimental import pallas as pl
from jax.experimental.pallas import tpu as pltpu


def _round_up(x, m):
    return ((x + m - 1) // m) * m


def rnn_classifier_kernel(xp_ref, whh_ref, wfc_ref, bfc_ref, out_ref, h_ref,
                          *, n_tc, tail_steps, n_chains, hb, unroll):
    """One grid step = (batch tile bi, time chunk ti).

    xp_ref  : (Tl, BT, Hp) bf16  pre-projected inputs (x@W_ih + b), streamed/pipelined
    whh_ref : (Hp, Hp)     bf16  hidden->hidden weight (resident, constant index map)
    wfc_ref : (Hp, Cp)     bf16  classifier weight     (resident)
    bfc_ref : (1,  Cp)     f32   classifier bias       (resident)
    out_ref : (BT, Cp)     f32   logits, written on the last time chunk only
    h_ref   : (n_chains, BT//n_chains, Hp) f32 scratch: hidden carried across chunks
    """
    ti = pl.program_id(1)

    @pl.when(ti == 0)
    def _():
        h_ref[...] = jnp.zeros_like(h_ref)

    Tl = xp_ref.shape[0]
    whh = whh_ref[...]
    cdt = whh.dtype

    def run_chunk(nsteps):
        # Serial recurrence over `nsteps` steps.  n_chains independent batch sub-chains
        # are interleaved inside every step so one chain's small MXU matmul overlaps the
        # other's EUP tanh / VALU adds (the chain is otherwise latency-bound).
        def step(t, carry):
            x_t = xp_ref[t].astype(jnp.float32)      # (BT, Hp); cast is off the h-chain
            new = []
            for c in range(n_chains):
                m = jnp.dot(carry[c].astype(cdt), whh,
                            preferred_element_type=jnp.float32)
                new.append(jnp.tanh(x_t[c * hb:(c + 1) * hb, :] + m))
            return tuple(new)

        carry = lax.fori_loop(0, nsteps, step,
                              tuple(h_ref[c] for c in range(n_chains)),
                              unroll=unroll)
        for c in range(n_chains):
            h_ref[c] = carry[c]
        return carry

    # NOTE: pinning W_hh in MXU weight registers (pltpu.matmul_push_rhs/acc_lhs/pop)
    # across the loop would also remove the per-step weight load; kept on jnp.dot here
    # for portability across v5e/v6e/v7x.
    if n_tc > 1:
        @pl.when(ti < n_tc - 1)
        def _():
            run_chunk(Tl)              # full chunks: select-free, fixed Tl steps

    @pl.when(ti == n_tc - 1)
    def _():
        carry = run_chunk(tail_steps)  # last chunk: statically runs only the valid steps
        for c in range(n_chains):
            logits = jnp.dot(carry[c].astype(cdt), wfc_ref[...],
                             preferred_element_type=jnp.float32) + bfc_ref[...]
            out_ref[c * hb:(c + 1) * hb, :] = logits.astype(out_ref.dtype)


def rnn_classifier_forward(x_tokens, params, *, time_chunk=64, batch_tile=None,
                           n_chains=2, compute_dtype=jnp.bfloat16,
                           vmem_limit_bytes=48 * 1024 * 1024):
    """x_tokens: (B, L) int32 token ids.  Returns logits (B, num_classes)."""
    emb_table = params["embedding"]          # (V, E), row 0 zeros (padding_idx=0)
    w_ih = params["w_ih"]                    # (E, H)
    w_hh = params["w_hh"]                    # (H, H)
    b = params["b"]                          # (1, H)   b_ih + b_hh
    w_fc = params["w_fc"]                    # (H, C)
    b_fc = params["b_fc"]                    # (1, C)

    B, L = x_tokens.shape
    E, H = w_ih.shape
    C = w_fc.shape[1]

    sub = 16 * n_chains                      # bf16-friendly sublane tile per sub-chain
    if batch_tile is None:
        bt = min(_round_up(B, sub), 256)     # fat tiles fill v6e/v7x 256-wide MXUs
        # v7x megacore: batch is the only 'parallel' grid axis, so prefer n_bt >= 2.
        if _round_up(B, bt) // bt < 2 and B > sub:
            bt = _round_up(-(-B // 2), sub)
        batch_tile = bt
    BT = _round_up(batch_tile, sub)
    B_pad = _round_up(B, BT)
    Hp = _round_up(H, 128)
    Cp = _round_up(C, 128)

    # Clamp the time chunk so the double-buffered streamed block fits a conservative
    # VMEM budget (v7x has 64 MiB / TensorCore; weights + out + h need room too).
    stream_budget = 24 * 1024 * 1024
    step_bytes = BT * Hp * jnp.dtype(compute_dtype).itemsize
    Tl = max(1, min(time_chunk, L, stream_budget // (2 * step_bytes)))
    L_pad = _round_up(L, Tl)
    n_bt = B_pad // BT
    n_tc = L_pad // Tl
    tail_steps = L - (n_tc - 1) * Tl
    assert 0 < tail_steps <= Tl and (n_tc - 1) * Tl + tail_steps == L
    HB = BT // n_chains

    # Embedding gather (time-major, no HBM transpose round trip) + the hoisted input
    # projection as ONE wrapper-side XLA matmul over the whole sequence; the kernel's
    # serial loop then only contains the small (HB,Hp)@(Hp,Hp) matmul + tanh.
    embedded = jnp.take(emb_table, x_tokens.T, axis=0)                 # (L, B, E) f32
    xproj = (embedded.reshape(L * B, E) @ w_ih + b).reshape(L, B, H)   # f32
    xproj = jnp.pad(xproj, ((0, L_pad - L), (0, B_pad - B), (0, Hp - H)))
    xproj = xproj.astype(compute_dtype)      # bf16 stream: halves the chunk DMA traffic

    whh_p = jnp.pad(w_hh, ((0, Hp - H), (0, Hp - H))).astype(compute_dtype)
    wfc_p = jnp.pad(w_fc, ((0, Hp - H), (0, Cp - C))).astype(compute_dtype)
    bfc_p = jnp.pad(b_fc, ((0, 0), (0, Cp - C))).astype(jnp.float32)

    unroll = True if Tl <= 16 else 8         # partial unroll avoids istream/vreg blowup

    kernel = functools.partial(
        rnn_classifier_kernel, n_tc=n_tc, tail_steps=tail_steps,
        n_chains=n_chains, hb=HB, unroll=unroll)

    out_padded = pl.pallas_call(
        kernel,
        out_shape=jax.ShapeDtypeStruct((B_pad, Cp), jnp.float32),
        grid=(n_bt, n_tc),
        in_specs=[
            pl.BlockSpec((Tl, BT, Hp), lambda bi, ti: (ti, bi, 0)),  # streamed xproj
            pl.BlockSpec((Hp, Hp), lambda bi, ti: (0, 0)),           # resident W_hh
            pl.BlockSpec((Hp, Cp), lambda bi, ti: (0, 0)),           # resident W_fc
            pl.BlockSpec((1, Cp), lambda bi, ti: (0, 0)),            # resident b_fc
        ],
        out_specs=pl.BlockSpec((BT, Cp), lambda bi, ti: (bi, 0)),
        scratch_shapes=[
            pltpu.VMEM((n_chains, HB, Hp), jnp.float32),  # hidden carried across chunks
        ],
        compiler_params=pltpu.CompilerParams(
            dimension_semantics=("parallel", "arbitrary"),
            vmem_limit_bytes=vmem_limit_bytes,
        ),
    )(xproj, whh_p, wfc_p, bfc_p)

    return out_padded[:B, :C]


def init_params(key, vocab_size, embedding_dim, hidden_dim, num_classes):
    ks = jax.random.split(key, 7)
    bound = 1.0 / jnp.sqrt(hidden_dim)

    emb = jax.random.normal(ks[0], (vocab_size, embedding_dim), jnp.float32)
    emb = emb.at[0].set(0.0)  # padding_idx=0

    w_ih = jax.random.uniform(ks[1], (embedding_dim, hidden_dim), jnp.float32, -bound, bound)
    w_hh = jax.random.uniform(ks[2], (hidden_dim, hidden_dim), jnp.float32, -bound, bound)
    b_ih = jax.random.uniform(ks[3], (hidden_dim,), jnp.float32, -bound, bound)
    b_hh = jax.random.uniform(ks[4], (hidden_dim,), jnp.float32, -bound, bound)

    fc_bound = 1.0 / jnp.sqrt(hidden_dim)
    w_fc = jax.random.uniform(ks[5], (hidden_dim, num_classes), jnp.float32, -fc_bound, fc_bound)
    b_fc = jax.random.uniform(ks[6], (num_classes,), jnp.float32, -fc_bound, fc_bound)

    return {
        "embedding": emb,
        "w_ih": w_ih,
        "w_hh": w_hh,
        "b": (b_ih + b_hh).reshape(1, hidden_dim),
        "w_fc": w_fc,
        "b_fc": b_fc.reshape(1, num_classes),
    }


if __name__ == "__main__":
    vocab_size = 16
    embedding_dim = 32
    hidden_dim = 32
    num_classes = 4
    batch = 2
    seq_len = 8

    key = jax.random.PRNGKey(0)
    k_params, k_tokens = jax.random.split(key)

    params = init_params(k_params, vocab_size, embedding_dim, hidden_dim, num_classes)
    x_tokens = jax.random.randint(k_tokens, (batch, seq_len), 0, vocab_size, dtype=jnp.int32)

    logits = rnn_classifier_forward(x_tokens, params)
    jax.block_until_ready(logits)

    # Pure-JAX f32 reference for the recurrence semantics.
    def ref_forward(x_tokens, p):
        emb = jnp.take(p["embedding"], x_tokens, axis=0)  # (B, L, E)
        h = jnp.zeros((x_tokens.shape[0], hidden_dim), jnp.float32)
        for t in range(seq_len):
            h = jnp.tanh(emb[:, t, :] @ p["w_ih"] + h @ p["w_hh"] + p["b"])
        return h @ p["w_fc"] + p["b_fc"]

    ref = ref_forward(x_tokens, params)
    assert logits.shape == (batch, num_classes)
    # bf16 streamed inputs + bf16 MXU operands (f32 accumulation) vs f32 reference:
    # tolerance loosened accordingly; errors stay small at this L/H.
    err = jnp.max(jnp.abs(logits - ref))
    assert jnp.allclose(logits, ref, atol=3e-2, rtol=3e-2), f"max abs err {err}"

    print("KERNEL_OK")
</pallas_src>

<mosaic_0001>
module attributes {stable_mosaic.version = 11 : i64} {
  func.func @rnn_classifier_kernel(%arg0: i32, %arg1: i32, %arg2: memref<8x32x128xbf16, #tpu.memory_space<vmem>>, %arg3: memref<128x128xbf16, #tpu.memory_space<vmem>>, %arg4: memref<128x128xbf16, #tpu.memory_space<vmem>>, %arg5: memref<1x128xf32, #tpu.memory_space<vmem>>, %arg6: memref<32x128xf32, #tpu.memory_space<vmem>>, %arg7: memref<2x16x128xf32, #tpu.memory_space<vmem>>) attributes {dimension_semantics = [#tpu.dimension_semantics<parallel>, #tpu.dimension_semantics<arbitrary>], iteration_bounds = array<i64: 1, 1>, scalar_prefetch = 0 : i64, scratch_operands = 1 : i64, tpu.core_type = #tpu.core_type<tc>, window_params = [{transform_indices = @transform_0, window_bounds = array<i64: 8, 32, 128>}, {pipeline_mode = #tpu.pipeline_mode<synchronous>, transform_indices = @transform_1, window_bounds = array<i64: 128, 128>}, {pipeline_mode = #tpu.pipeline_mode<synchronous>, transform_indices = @transform_2, window_bounds = array<i64: 128, 128>}, {pipeline_mode = #tpu.pipeline_mode<synchronous>, transform_indices = @transform_3, window_bounds = array<i64: 1, 128>}, {transform_indices = @transform_4, window_bounds = array<i64: 32, 128>}]} {
    %c0_i32 = arith.constant 0 : i32
    %0 = arith.cmpi eq, %arg1, %c0_i32 : i32
    %1 = arith.extui %0 : i1 to i32
    %c0_i32_0 = arith.constant 0 : i32
    %2 = arith.cmpi ne, %1, %c0_i32_0 : i32
    scf.if %2 {
      %cst = arith.constant 0.000000e+00 : f32
      %7 = vector.broadcast %cst : f32 to vector<2x16x128xf32>
      %c0_4 = arith.constant 0 : index
      %c0_5 = arith.constant 0 : index
      %c0_6 = arith.constant 0 : index
      %8 = vector.load %arg7[%c0_4, %c0_5, %c0_6] : memref<2x16x128xf32, #tpu.memory_space<vmem>>, vector<2x16x128xf32>
      tpu.vector_store %arg7[%c0_4, %c0_5, %c0_6], %7 {strides = array<i32>} : memref<2x16x128xf32, #tpu.memory_space<vmem>>, vector<2x16x128xf32>,
    } else {
    }
    %c0 = arith.constant 0 : index
    %c0_1 = arith.constant 0 : index
    %3 = vector.load %arg3[%c0, %c0_1] : memref<128x128xbf16, #tpu.memory_space<vmem>>, vector<128x128xbf16>
    %c0_i32_2 = arith.constant 0 : i32
    %4 = arith.cmpi eq, %arg1, %c0_i32_2 : i32
    %5 = arith.extui %4 : i1 to i32
    %c0_i32_3 = arith.constant 0 : i32
    %6 = arith.cmpi ne, %5, %c0_i32_3 : i32
    scf.if %6 {
      %c0_4 = arith.constant 0 : index
      %c0_5 = arith.constant 0 : index
      %c0_6 = arith.constant 0 : index
      %7 = vector.load %arg7[%c0_4, %c0_5, %c0_6] : memref<2x16x128xf32, #tpu.memory_space<vmem>>, vector<1x16x128xf32>
      %8 = vector.shape_cast %7 : vector<1x16x128xf32> to vector<16x128xf32>
      %c1 = arith.constant 1 : index
      %c0_7 = arith.constant 0 : index
      %c0_8 = arith.constant 0 : index
      %9 = vector.load %arg7[%c1, %c0_7, %c0_8] : memref<2x16x128xf32, #tpu.memory_space<vmem>>, vector<1x16x128xf32>
      %10 = vector.shape_cast %9 : vector<1x16x128xf32> to vector<16x128xf32>
      %c0_i32_9 = arith.constant 0 : i32
      %11 = arith.index_cast %c0_i32_9 : i32 to index
      %c0_10 = arith.constant 0 : index
      %c0_11 = arith.constant 0 : index
      %12 = vector.load %arg2[%11, %c0_10, %c0_11] : memref<8x32x128xbf16, #tpu.memory_space<vmem>>, vector<1x32x128xbf16>
      %13 = vector.shape_cast %12 : vector<1x32x128xbf16> to vector<32x128xbf16>
      %14 = arith.extf %13 : vector<32x128xbf16> to vector<32x128xf32>
      %15 = arith.truncf %8 : vector<16x128xf32> to vector<16x128xbf16>
      %cst = arith.constant dense<0.000000e+00> : vector<16x128xf32>
      %16 = tpu.matmul %15, %3, %cst {dimension_numbers = #tpu.dot_dimension_numbers<[1], [0], [0], [1], [0, 0, 1, 1], [], []>} : vector<16x128xbf16>, vector<128x128xbf16>, vector<16x128xf32> -> vector<16x128xf32>
      %17 = vector.extract_strided_slice %14 {offsets = [0, 0], sizes = [16, 128], strides = [1, 1]} : vector<32x128xf32> to vector<16x128xf32>
      %18 = arith.addf %17, %16 : vector<16x128xf32>
      %19 = math.tanh %18 : vector<16x128xf32>
      %20 = arith.truncf %10 : vector<16x128xf32> to vector<16x128xbf16>
      %cst_12 = arith.constant dense<0.000000e+00> : vector<16x128xf32>
      %21 = tpu.matmul %20, %3, %cst_12 {dimension_numbers = #tpu.dot_dimension_numbers<[1], [0], [0], [1], [0, 0, 1, 1], [], []>} : vector<16x128xbf16>, vector<128x128xbf16>, vector<16x128xf32> -> vector<16x128xf32>
      %22 = vector.extract_strided_slice %14 {offsets = [16, 0], sizes = [16, 128], strides = [1, 1]} : vector<32x128xf32> to vector<16x128xf32>
      %23 = arith.addf %22, %21 : vector<16x128xf32>
      %24 = math.tanh %23 : vector<16x128xf32>
      %c1_i32 = arith.constant 1 : i32
      %25 = arith.index_cast %c1_i32 : i32 to index
      %c0_13 = arith.constant 0 : index
      %c0_14 = arith.constant 0 : index
      %26 = vector.load %arg2[%25, %c0_13, %c0_14] : memref<8x32x128xbf16, #tpu.memory_space<vmem>>, vector<1x32x128xbf16>
      %27 = vector.shape_cast %26 : vector<1x32x128xbf16> to vector<32x128xbf16>
      %28 = arith.extf %27 : vector<32x128xbf16> to vector<32x128xf32>
      %29 = arith.truncf %19 : vector<16x128xf32> to vector<16x128xbf16>
      %cst_15 = arith.constant dense<0.000000e+00> : vector<16x128xf32>
      %30 = tpu.matmul %29, %3, %cst_15 {dimension_numbers = #tpu.dot_dimension_numbers<[1], [0], [0], [1], [0, 0, 1, 1], [], []>} : vector<16x128xbf16>, vector<128x128xbf16>, vector<16x128xf32> -> vector<16x128xf32>
      %31 = vector.extract_strided_slice %28 {offsets = [0, 0], sizes = [16, 128], strides = [1, 1]} : vector<32x128xf32> to vector<16x128xf32>
      %32 = arith.addf %31, %30 : vector<16x128xf32>
      %33 = math.tanh %32 : vector<16x128xf32>
      %34 = arith.truncf %24 : vector<16x128xf32> to vector<16x128xbf16>
      %cst_16 = arith.constant dense<0.000000e+00> : vector<16x128xf32>
      %35 = tpu.matmul %34, %3, %cst_16 {dimension_numbers = #tpu.dot_dimension_numbers<[1], [0], [0], [1], [0, 0, 1, 1], [], []>} : vector<16x128xbf16>, vector<128x128xbf16>, vector<16x128xf32> -> vector<16x128xf32>
      %36 = vector.extract_strided_slice %28 {offsets = [16, 0], sizes = [16, 128], strides = [1, 1]} : vector<32x128xf32> to vector<16x128xf32>
      %37 = arith.addf %36, %35 : vector<16x128xf32>
      %38 = math.tanh %37 : vector<16x128xf32>
      %c2_i32 = arith.constant 2 : i32
      %39 = arith.index_cast %c2_i32 : i32 to index
      %c0_17 = arith.constant 0 : index
      %c0_18 = arith.constant 0 : index
      %40 = vector.load %arg2[%39, %c0_17, %c0_18] : memref<8x32x128xbf16, #tpu.memory_space<vmem>>, vector<1x32x128xbf16>
      %41 = vector.shape_cast %40 : vector<1x32x128xbf16> to vector<32x128xbf16>
      %42 = arith.extf %41 : vector<32x128xbf16> to vector<32x128xf32>
      %43 = arith.truncf %33 : vector<16x128xf32> to vector<16x128xbf16>
      %cst_19 = arith.constant dense<0.000000e+00> : vector<16x128xf32>
      %44 = tpu.matmul %43, %3, %cst_19 {dimension_numbers = #tpu.dot_dimension_numbers<[1], [0], [0], [1], [0, 0, 1, 1], [], []>} : vector<16x128xbf16>, vector<128x128xbf16>, vector<16x128xf32> -> vector<16x128xf32>
      %45 = vector.extract_strided_slice %42 {offsets = [0, 0], sizes = [16, 128], strides = [1, 1]} : vector<32x128xf32> to vector<16x128xf32>
      %46 = arith.addf %45, %44 : vector<16x128xf32>
      %47 = math.tanh %46 : vector<16x128xf32>
      %48 = arith.truncf %38 : vector<16x128xf32> to vector<16x128xbf16>
      %cst_20 = arith.constant dense<0.000000e+00> : vector<16x128xf32>
      %49 = tpu.matmul %48, %3, %cst_20 {dimension_numbers = #tpu.dot_dimension_numbers<[1], [0], [0], [1], [0, 0, 1, 1], [], []>} : vector<16x128xbf16>, vector<128x128xbf16>, vector<16x128xf32> -> vector<16x128xf32>
      %50 = vector.extract_strided_slice %42 {offsets = [16, 0], sizes = [16, 128], strides = [1, 1]} : vector<32x128xf32> to vector<16x128xf32>
      %51 = arith.addf %50, %49 : vector<16x128xf32>
      %52 = math.tanh %51 : vector<16x128xf32>
      %c3_i32 = arith.constant 3 : i32
      %53 = arith.index_cast %c3_i32 : i32 to index
      %c0_21 = arith.constant 0 : index
      %c0_22 = arith.constant 0 : index
      %54 = vector.load %arg2[%53, %c0_21, %c0_22] : memref<8x32x128xbf16, #tpu.memory_space<vmem>>, vector<1x32x128xbf16>
      %55 = vector.shape_cast %54 : vector<1x32x128xbf16> to vector<32x128xbf16>
      %56 = arith.extf %55 : vector<32x128xbf16> to vector<32x128xf32>
      %57 = arith.truncf %47 : vector<16x128xf32> to vector<16x128xbf16>
      %cst_23 = arith.constant dense<0.000000e+00> : vector<16x128xf32>
      %58 = tpu.matmul %57, %3, %cst_23 {dimension_numbers = #tpu.dot_dimension_numbers<[1], [0], [0], [1], [0, 0, 1, 1], [], []>} : vector<16x128xbf16>, vector<128x128xbf16>, vector<16x128xf32> -> vector<16x128xf32>
      %59 = vector.extract_strided_slice %56 {offsets = [0, 0], sizes = [16, 128], strides = [1, 1]} : vector<32x128xf32> to vector<16x128xf32>
      %60 = arith.addf %59, %58 : vector<16x128xf32>
      %61 = math.tanh %60 : vector<16x128xf32>
      %62 = arith.truncf %52 : vector<16x128xf32> to vector<16x128xbf16>
      %cst_24 = arith.constant dense<0.000000e+00> : vector<16x128xf32>
      %63 = tpu.matmul %62, %3, %cst_24 {dimension_numbers = #tpu.dot_dimension_numbers<[1], [0], [0], [1], [0, 0, 1, 1], [], []>} : vector<16x128xbf16>, vector<128x128xbf16>, vector<16x128xf32> -> vector<16x128xf32>
      %64 = vector.extract_strided_slice %56 {offsets = [16, 0], sizes = [16, 128], strides = [1, 1]} : vector<32x128xf32> to vector<16x128xf32>
      %65 = arith.addf %64, %63 : vector<16x128xf32>
      %66 = math.tanh %65 : vector<16x128xf32>
      %c4_i32 = arith.constant 4 : i32
      %67 = arith.index_cast %c4_i32 : i32 to index
      %c0_25 = arith.constant 0 : index
      %c0_26 = arith.constant 0 : index
      %68 = vector.load %arg2[%67, %c0_25, %c0_26] : memref<8x32x128xbf16, #tpu.memory_space<vmem>>, vector<1x32x128xbf16>
      %69 = vector.shape_cast %68 : vector<1x32x128xbf16> to vector<32x128xbf16>
      %70 = arith.extf %69 : vector<32x128xbf16> to vector<32x128xf32>
      %71 = arith.truncf %61 : vector<16x128xf32> to vector<16x128xbf16>
      %cst_27 = arith.constant dense<0.000000e+00> : vector<16x128xf32>
      %72 = tpu.matmul %71, %3, %cst_27 {dimension_numbers = #tpu.dot_dimension_numbers<[1], [0], [0], [1], [0, 0, 1, 1], [], []>} : vector<16x128xbf16>, vector<128x128xbf16>, vector<16x128xf32> -> vector<16x128xf32>
      %73 = vector.extract_strided_slice %70 {offsets = [0, 0], sizes = [16, 128], strides = [1, 1]} : vector<32x128xf32> to vector<16x128xf32>
      %74 = arith.addf %73, %72 : vector<16x128xf32>
      %75 = math.tanh %74 : vector<16x128xf32>
      %76 = arith.truncf %66 : vector<16x128xf32> to vector<16x128xbf16>
      %cst_28 = arith.constant dense<0.000000e+00> : vector<16x128xf32>
      %77 = tpu.matmul %76, %3, %cst_28 {dimension_numbers = #tpu.dot_dimension_numbers<[1], [0], [0], [1], [0, 0, 1, 1], [], []>} : vector<16x128xbf16>, vector<128x128xbf16>, vector<16x128xf32> -> vector<16x128xf32>
      %78 = vector.extract_strided_slice %70 {offsets = [16, 0], sizes = [16, 128], strides = [1, 1]} : vector<32x128xf32> to vector<16x128xf32>
      %79 = arith.addf %78, %77 : vector<16x128xf32>
      %80 = math.tanh %79 : vector<16x128xf32>
      %c5_i32 = arith.constant 5 : i32
      %81 = arith.index_cast %c5_i32 : i32 to index
      %c0_29 = arith.constant 0 : index
      %c0_30 = arith.constant 0 : index
      %82 = vector.load %arg2[%81, %c0_29, %c0_30] : memref<8x32x128xbf16, #tpu.memory_space<vmem>>, vector<1x32x128xbf16>
      %83 = vector.shape_cast %82 : vector<1x32x128xbf16> to vector<32x128xbf16>
      %84 = arith.extf %83 : vector<32x128xbf16> to vector<32x128xf32>
      %85 = arith.truncf %75 : vector<16x128xf32> to vector<16x128xbf16>
      %cst_31 = arith.constant dense<0.000000e+00> : vector<16x128xf32>
      %86 = tpu.matmul %85, %3, %cst_31 {dimension_numbers = #tpu.dot_dimension_numbers<[1], [0], [0], [1], [0, 0, 1, 1], [], []>} : vector<16x128xbf16>, vector<128x128xbf16>, vector<16x128xf32> -> vector<16x128xf32>
      %87 = vector.extract_strided_slice %84 {offsets = [0, 0], sizes = [16, 128], strides = [1, 1]} : vector<32x128xf32> to vector<16x128xf32>
      %88 = arith.addf %87, %86 : vector<16x128xf32>
      %89 = math.tanh %88 : vector<16x128xf32>
      %90 = arith.truncf %80 : vector<16x128xf32> to vector<16x128xbf16>
      %cst_32 = arith.constant dense<0.000000e+00> : vector<16x128xf32>
      %91 = tpu.matmul %90, %3, %cst_32 {dimension_numbers = #tpu.dot_dimension_numbers<[1], [0], [0], [1], [0, 0, 1, 1], [], []>} : vector<16x128xbf16>, vector<128x128xbf16>, vector<16x128xf32> -> vector<16x128xf32>
      %92 = vector.extract_strided_slice %84 {offsets = [16, 0], sizes = [16, 128], strides = [1, 1]} : vector<32x128xf32> to vector<16x128xf32>
      %93 = arith.addf %92, %91 : vector<16x128xf32>
      %94 = math.tanh %93 : vector<16x128xf32>
      %c6_i32 = arith.constant 6 : i32
      %95 = arith.index_cast %c6_i32 : i32 to index
      %c0_33 = arith.constant 0 : index
      %c0_34 = arith.constant 0 : index
      %96 = vector.load %arg2[%95, %c0_33, %c0_34] : memref<8x32x128xbf16, #tpu.memory_space<vmem>>, vector<1x32x128xbf16>
      %97 = vector.shape_cast %96 : vector<1x32x128xbf16> to vector<32x128xbf16>
      %98 = arith.extf %97 : vector<32x128xbf16> to vector<32x128xf32>
      %99 = arith.truncf %89 : vector<16x128xf32> to vector<16x128xbf16>
      %cst_35 = arith.constant dense<0.000000e+00> : vector<16x128xf32>
      %100 = tpu.matmul %99, %3, %cst_35 {dimension_numbers = #tpu.dot_dimension_numbers<[1], [0], [0], [1], [0, 0, 1, 1], [], []>} : vector<16x128xbf16>, vector<128x128xbf16>, vector<16x128xf32> -> vector<16x128xf32>
      %101 = vector.extract_strided_slice %98 {offsets = [0, 0], sizes = [16, 128], strides = [1, 1]} : vector<32x128xf32> to vector<16x128xf32>
      %102 = arith.addf %101, %100 : vector<16x128xf32>
      %103 = math.tanh %102 : vector<16x128xf32>
      %104 = arith.truncf %94 : vector<16x128xf32> to vector<16x128xbf16>
      %cst_36 = arith.constant dense<0.000000e+00> : vector<16x128xf32>
      %105 = tpu.matmul %104, %3, %cst_36 {dimension_numbers = #tpu.dot_dimension_numbers<[1], [0], [0], [1], [0, 0, 1, 1], [], []>} : vector<16x128xbf16>, vector<128x128xbf16>, vector<16x128xf32> -> vector<16x128xf32>
      %106 = vector.extract_strided_slice %98 {offsets = [16, 0], sizes = [16, 128], strides = [1, 1]} : vector<32x128xf32> to vector<16x128xf32>
      %107 = arith.addf %106, %105 : vector<16x128xf32>
      %108 = math.tanh %107 : vector<16x128xf32>
      %c7_i32 = arith.constant 7 : i32
      %109 = arith.index_cast %c7_i32 : i32 to index
      %c0_37 = arith.constant 0 : index
      %c0_38 = arith.constant 0 : index
      %110 = vector.load %arg2[%109, %c0_37, %c0_38] : memref<8x32x128xbf16, #tpu.memory_space<vmem>>, vector<1x32x128xbf16>
      %111 = vector.shape_cast %110 : vector<1x32x128xbf16> to vector<32x128xbf16>
      %112 = arith.extf %111 : vector<32x128xbf16> to vector<32x128xf32>
      %113 = arith.truncf %103 : vector<16x128xf32> to vector<16x128xbf16>
      %cst_39 = arith.constant dense<0.000000e+00> : vector<16x128xf32>
      %114 = tpu.matmul %113, %3, %cst_39 {dimension_numbers = #tpu.dot_dimension_numbers<[1], [0], [0], [1], [0, 0, 1, 1], [], []>} : vector<16x128xbf16>, vector<128x128xbf16>, vector<16x128xf32> -> vector<16x128xf32>
      %115 = vector.extract_strided_slice %112 {offsets = [0, 0], sizes = [16, 128], strides = [1, 1]} : vector<32x128xf32> to vector<16x128xf32>
      %116 = arith.addf %115, %114 : vector<16x128xf32>
      %117 = math.tanh %116 : vector<16x128xf32>
      %118 = arith.truncf %108 : vector<16x128xf32> to vector<16x128xbf16>
      %cst_40 = arith.constant dense<0.000000e+00> : vector<16x128xf32>
      %119 = tpu.matmul %118, %3, %cst_40 {dimension_numbers = #tpu.dot_dimension_numbers<[1], [0], [0], [1], [0, 0, 1, 1], [], []>} : vector<16x128xbf16>, vector<128x128xbf16>, vector<16x128xf32> -> vector<16x128xf32>
      %120 = vector.extract_strided_slice %112 {offsets = [16, 0], sizes = [16, 128], strides = [1, 1]} : vector<32x128xf32> to vector<16x128xf32>
      %121 = arith.addf %120, %119 : vector<16x128xf32>
      %122 = math.tanh %121 : vector<16x128xf32>
      %c8_i32 = arith.constant 8 : i32
      %c0_41 = arith.constant 0 : index
      %c0_42 = arith.constant 0 : index
      %c0_43 = arith.constant 0 : index
      %123 = vector.load %arg7[%c0_41, %c0_42, %c0_43] : memref<2x16x128xf32, #tpu.memory_space<vmem>>, vector<1x16x128xf32>
      %124 = vector.shape_cast %123 : vector<1x16x128xf32> to vector<16x128xf32>
      %125 = vector.shape_cast %117 : vector<16x128xf32> to vector<1x16x128xf32>
      tpu.vector_store %arg7[%c0_41, %c0_42, %c0_43], %125 {strides = array<i32>} : memref<2x16x128xf32, #tpu.memory_space<vmem>>, vector<1x16x128xf32>,
      %c1_44 = arith.constant 1 : index
      %c0_45 = arith.constant 0 : index
      %c0_46 = arith.constant 0 : index
      %126 = vector.load %arg7[%c1_44, %c0_45, %c0_46] : memref<2x16x128xf32, #tpu.memory_space<vmem>>, vector<1x16x128xf32>
      %127 = vector.shape_cast %126 : vector<1x16x128xf32> to vector<16x128xf32>
      %128 = vector.shape_cast %122 : vector<16x128xf32> to vector<1x16x128xf32>
      tpu.vector_store %arg7[%c1_44, %c0_45, %c0_46], %128 {strides = array<i32>} : memref<2x16x128xf32, #tpu.memory_space<vmem>>, vector<1x16x128xf32>,
      %129 = arith.truncf %117 : vector<16x128xf32> to vector<16x128xbf16>
      %c0_47 = arith.constant 0 : index
      %c0_48 = arith.constant 0 : index
      %130 = vector.load %arg4[%c0_47, %c0_48] : memref<128x128xbf16, #tpu.memory_space<vmem>>, vector<128x128xbf16>
      %cst_49 = arith.constant dense<0.000000e+00> : vector<16x128xf32>
      %131 = tpu.matmul %129, %130, %cst_49 {dimension_numbers = #tpu.dot_dimension_numbers<[1], [0], [0], [1], [0, 0, 1, 1], [], []>} : vector<16x128xbf16>, vector<128x128xbf16>, vector<16x128xf32> -> vector<16x128xf32>
      %c0_50 = arith.constant 0 : index
      %c0_51 = arith.constant 0 : index
      %132 = vector.load %arg5[%c0_50, %c0_51] : memref<1x128xf32, #tpu.memory_space<vmem>>, vector<1x128xf32>
      %133 = vector.broadcast %132 : vector<1x128xf32> to vector<16x128xf32>
      %134 = arith.addf %131, %133 : vector<16x128xf32>
      %c0_52 = arith.constant 0 : index
      %c0_53 = arith.constant 0 : index
      %135 = vector.load %arg6[%c0_52, %c0_53] : memref<32x128xf32, #tpu.memory_space<vmem>>, vector<16x128xf32>
      tpu.vector_store %arg6[%c0_52, %c0_53], %134 {strides = array<i32>} : memref<32x128xf32, #tpu.memory_space<vmem>>, vector<16x128xf32>,
      %136 = arith.truncf %122 : vector<16x128xf32> to vector<16x128xbf16>
      %c0_54 = arith.constant 0 : index
      %c0_55 = arith.constant 0 : index
      %137 = vector.load %arg4[%c0_54, %c0_55] : memref<128x128xbf16, #tpu.memory_space<vmem>>, vector<128x128xbf16>
      %cst_56 = arith.constant dense<0.000000e+00> : vector<16x128xf32>
      %138 = tpu.matmul %136, %137, %cst_56 {dimension_numbers = #tpu.dot_dimension_numbers<[1], [0], [0], [1], [0, 0, 1, 1], [], []>} : vector<16x128xbf16>, vector<128x128xbf16>, vector<16x128xf32> -> vector<16x128xf32>
      %c0_57 = arith.constant 0 : index
      %c0_58 = arith.constant 0 : index
      %139 = vector.load %arg5[%c0_57, %c0_58] : memref<1x128xf32, #tpu.memory_space<vmem>>, vector<1x128xf32>
      %140 = vector.broadcast %139 : vector<1x128xf32> to vector<16x128xf32>
      %141 = arith.addf %138, %140 : vector<16x128xf32>
      %c16 = arith.constant 16 : index
      %c0_59 = arith.constant 0 : index
      %142 = vector.load %arg6[%c16, %c0_59] : memref<32x128xf32, #tpu.memory_space<vmem>>, vector<16x128xf32>
      tpu.vector_store %arg6[%c16, %c0_59], %141 {strides = array<i32>} : memref<32x128xf32, #tpu.memory_space<vmem>>, vector<16x128xf32>,
    } else {
    }
    return
  }
  func.func @transform_0(%arg0: i32, %arg1: i32) -> (i32, i32, i32) {
    %c0_i32 = arith.constant 0 : i32
    %c0_i32_0 = arith.constant 0 : i32
    return %arg1, %arg0, %c0_i32 : i32, i32, i32
  }
  func.func @transform_1(%arg0: i32, %arg1: i32) -> (i32, i32) {
    %c0_i32 = arith.constant 0 : i32
    %c0_i32_0 = arith.constant 0 : i32
    %c0_i32_1 = arith.constant 0 : i32
    return %c0_i32, %c0_i32_0 : i32, i32
  }
  func.func @transform_2(%arg0: i32, %arg1: i32) -> (i32, i32) {
    %c0_i32 = arith.constant 0 : i32
    %c0_i32_0 = arith.constant 0 : i32
    %c0_i32_1 = arith.constant 0 : i32
    return %c0_i32, %c0_i32_0 : i32, i32
  }
  func.func @transform_3(%arg0: i32, %arg1: i32) -> (i32, i32) {
    %c0_i32 = arith.constant 0 : i32
    %c0_i32_0 = arith.constant 0 : i32
    %c0_i32_1 = arith.constant 0 : i32
    return %c0_i32, %c0_i32_0 : i32, i32
  }
  func.func @transform_4(%arg0: i32, %arg1: i32) -> (i32, i32) {
    %c0_i32 = arith.constant 0 : i32
    %c0_i32_0 = arith.constant 0 : i32
    return %arg0, %c0_i32 : i32, i32
  }
}

</mosaic_0001>

<llo_original>
// kernel: tpu_custom_call.1
$region0: #{tpu_custom_call.1}
  #allocation0 [shape = 'u32[]', space=smem, size = 0x4, offset = 0x4, fixed_abs, tag = 'smem constant byte address 0x4 - core index']
  #allocation1 [shape = 'u32[144,128]{1,0:T(1,128)}', space=vmem, size = 0x12000, scoped, tag = 'internal scratch']
  #allocation2 [shape = 'f32[2,16,128]{2,1,0:T(8,128)}', space=vmem, size = 0x4000, scoped, tag = 'scratch operand']
  %s0 = inlined_call_operand.hbm [shape: bf16[8,32,128], index: 0, kind: input, shape index: {}]
  %s1 = inlined_call_operand.hbm [shape: bf16[128,128], index: 1, kind: input, shape index: {}]
  %s2 = inlined_call_operand.hbm [shape: bf16[128,128], index: 2, kind: input, shape index: {}]
  %s3 = inlined_call_operand.vmem [shape: f32[1,128], index: 3, kind: input, shape index: {}]
  %s4 = inlined_call_operand.hbm [shape: f32[32,128], index: 4, kind: output, shape index: {}]
  %s5 = sld [smem:[#allocation0]]
  $region46: #{tpu_custom_call.1} parent=0
    _
  %s7 = ssub.s32 1, %s5
  %s8 = scalar_select 0, %s7, %s5
  $region1: #{tpu_custom_call.1} parent=0
    #allocation3 [shape = 'u8[65536]{0}', space=vmem, size = 0x10000, scoped, tag = 'input window, operand 0, single buffered']
    #allocation4 [shape = 's32[1]{0}', space=sflag, size = 0x4, scoped, tag = 'scoped memory for tpu_custom_call.1']
    #allocation5 [shape = 's32[1]{0}', space=sflag, size = 0x4, scoped, tag = 'scoped memory for tpu_custom_call.1']
    #allocation6 [shape = 'u8[32768]{0}', space=vmem, size = 0x8000, scoped, tag = 'input window, operand 1, single buffered']
    #allocation7 [shape = 's32[1]{0}', space=sflag, size = 0x4, scoped, tag = 'scoped memory for tpu_custom_call.1']
    #allocation8 [shape = 'u8[32768]{0}', space=vmem, size = 0x8000, scoped, tag = 'input window, operand 2, single buffered']
    #allocation9 [shape = 'u8[16384]{0}', space=vmem, size = 0x4000, scoped, tag = 'output window, operand 0, single buffered']
    %9 = vsyncpa [#allocation4], 0
    %10 = vsyncpa [#allocation7], 0
    %11 = vsyncpa [#allocation5], 0
    // Predicated region
    $region2: #{tpu_custom_call.1} parent=1 // pred_check
      _
    $region3: #{tpu_custom_call.1} parent=1 // pred_check_branch
      %13 = sbr.rel (0) target = $region5
    $region4: #{tpu_custom_call.1} parent=1 // pred_region
      %s15 = ssub.s32 2048, 2048
      %16 = vsyncadd [#allocation4], %s15
      %s17 = sshll.u32 [#allocation3], 4
      %s18 = int_to_ptr.vmem [resolvable:$true] %s17
      %23 = dma.hbm_to_vmem [thread:$0]  %s0, 2048, %s18, [#allocation4], 64, 64, 4
    $region5: #{tpu_custom_call.1} parent=1 // pred_fallthru
      _
    // Predicated region
    $region6: #{tpu_custom_call.1} parent=1 // pred_check
      _
    $region7: #{tpu_custom_call.1} parent=1 // pred_check_branch
      %25 = sbr.rel (0) target = $region9
    $region8: #{tpu_custom_call.1} parent=1 // pred_region
      %s27 = ssub.s32 1024, 1024
      %28 = vsyncadd [#allocation7], %s27
      %s29 = sshll.u32 [#allocation6], 4
      %s30 = int_to_ptr.vmem [resolvable:$true] %s29
      %35 = dma.hbm_to_vmem [thread:$0]  %s1, 1024, %s30, [#allocation7], 64, 64, 4
    $region9: #{tpu_custom_call.1} parent=1 // pred_fallthru
      _
    // Predicated region
    $region10: #{tpu_custom_call.1} parent=1 // pred_check
      _
    $region11: #{tpu_custom_call.1} parent=1 // pred_check_branch
      %37 = sbr.rel (0) target = $region13
    $region12: #{tpu_custom_call.1} parent=1 // pred_region
      %s39 = ssub.s32 1024, 1024
      %40 = vsyncadd [#allocation7], %s39
      %s41 = sshll.u32 [#allocation8], 4
      %s42 = int_to_ptr.vmem [resolvable:$true] %s41
      %47 = dma.hbm_to_vmem [thread:$0]  %s2, 1024, %s42, [#allocation7], 64, 64, 4
    $region13: #{tpu_custom_call.1} parent=1 // pred_fallthru
      _
    // Predicated region
    $region14: #{tpu_custom_call.1} parent=1 // pred_check
      _
    $region15: #{tpu_custom_call.1} parent=1 // pred_check_branch
      %49 = sbr.rel (0) target = $region17
    $region16: #{tpu_custom_call.1} parent=1 // pred_region
      _
    $region17: #{tpu_custom_call.1} parent=1 // pred_fallthru
      _
    // Predicated region
    $region18: #{tpu_custom_call.1} parent=1 // pred_check
      _
    $region19: #{tpu_custom_call.1} parent=1 // pred_check_branch
      %51 = sbr.rel (0) target = $region21
    $region20: #{tpu_custom_call.1} parent=1 // pred_region
      %52 = dma.done [#allocation4], 2048
    $region21: #{tpu_custom_call.1} parent=1 // pred_fallthru
      _
    // Predicated region
    $region22: #{tpu_custom_call.1} parent=1 // pred_check
      _
    $region23: #{tpu_custom_call.1} parent=1 // pred_check_branch
      %54 = sbr.rel (0) target = $region25
    $region24: #{tpu_custom_call.1} parent=1 // pred_region
      %55 = dma.done [#allocation7], 1024
    $region25: #{tpu_custom_call.1} parent=1 // pred_fallthru
      _
    // Predicated region
    $region26: #{tpu_custom_call.1} parent=1 // pred_check
      _
    $region27: #{tpu_custom_call.1} parent=1 // pred_check_branch
      %57 = sbr.rel (0) target = $region29
    $region28: #{tpu_custom_call.1} parent=1 // pred_region
      %58 = dma.done [#allocation7], 1024
    $region29: #{tpu_custom_call.1} parent=1 // pred_fallthru
      _
    %p60 = scmp.eq.s32.totalorder 0, 0
    // Predicated region
    $region30: #{tpu_custom_call.1} parent=1 // pred_check
      %p61 = pneg %p60
    $region31: #{tpu_custom_call.1} parent=1 // pred_check_branch
      %63 = sbr.rel (%p61) target = $region33
    $region32: #{tpu_custom_call.1} parent=1 // pred_region
      %64 = vst [vmem:[#allocation2] sm:$0xff] 0.0
      %65 = vst [vmem:[#allocation2 + $0x8] sm:$0xff] 0.0
      %66 = vst [vmem:[#allocation2 + $0x10] sm:$0xff] 0.0
      %67 = vst [vmem:[#allocation2 + $0x18] sm:$0xff] 0.0
    $region33: #{tpu_custom_call.1} parent=1 // pred_fallthru
      _
    %v68 = vld [vmem:[#allocation6] sm:$0xf]
    %v69 = vld [vmem:[#allocation6 + $0x4] sm:$0xf]
    %v70 = vld [vmem:[#allocation6 + $0x8] sm:$0xf]
    %v71 = vld [vmem:[#allocation6 + $0xc] sm:$0xf]
    %v72 = vld [vmem:[#allocation6 + $0x10] sm:$0xf]
    %v73 = vld [vmem:[#allocation6 + $0x14] sm:$0xf]
    %v74 = vld [vmem:[#allocation6 + $0x18] sm:$0xf]
    %v75 = vld [vmem:[#allocation6 + $0x1c] sm:$0xf]
    %v76 = vld [vmem:[#allocation6 + $0x20] sm:$0xf]
    %v77 = vld [vmem:[#allocation6 + $0x24] sm:$0xf]
    %v78 = vld [vmem:[#allocation6 + $0x28] sm:$0xf]
    %v79 = vld [vmem:[#allocation6 + $0x2c] sm:$0xf]
    %v80 = vld [vmem:[#allocation6 + $0x30] sm:$0xf]
    %v81 = vld [vmem:[#allocation6 + $0x34] sm:$0xf]
    %v82 = vld [vmem:[#allocation6 + $0x38] sm:$0xf]
    %v83 = vld [vmem:[#allocation6 + $0x3c] sm:$0xf]
    // Predicated region
    $region34: #{tpu_custom_call.1} parent=1 // pred_check
      %p84 = pneg %p60
    $region35: #{tpu_custom_call.1} parent=1 // pred_check_branch
      %86 = sbr.rel (%p84) target = $region37
    $region36: #{tpu_custom_call.1} parent=1 // pred_region
      %v87 = vld [vmem:[#allocation2] sm:$0xff]
      %v88 = vld [vmem:[#allocation2 + $0x8] sm:$0xff]
      %s89 = scalar_lea.vmem [#allocation2], 16
      %v90 = vld [vmem:[%s89] sm:$0xff]
      %v91 = vld [vmem:[%s89 + $0x8] sm:$0xff]
      %v92 = vld [vmem:[#allocation3] sm:$0xf]
      %v93 = vld [vmem:[#allocation3 + $0x4] sm:$0xf]
      %v94 = vld [vmem:[#allocation3 + $0x8] sm:$0xf]
      %v95 = vld [vmem:[#allocation3 + $0xc] sm:$0xf]
      %v96 = vunpack.c.l.bf16 %v92
      %v97 = vunpack.c.l.bf16 %v93
      %v98 = vunpack.c.l.bf16 %v94
      %v99 = vunpack.c.l.bf16 %v95
      %v100 = vpack.c.bf16 %v88, %v87
      %v117 = vunpack.c.l.b16 %v68
      %v118 = vunpack.c.l.b16 %v69
      %v119 = vunpack.c.l.b16 %v70
      %v120 = vunpack.c.l.b16 %v71
      %v121 = vunpack.c.l.b16 %v72
      %v122 = vunpack.c.l.b16 %v73
      %v123 = vunpack.c.l.b16 %v74
      %v124 = vunpack.c.l.b16 %v75
      %v125 = vunpack.c.l.b16 %v76
      %v126 = vunpack.c.l.b16 %v77
      %v127 = vunpack.c.l.b16 %v78
      %v128 = vunpack.c.l.b16 %v79
      %v129 = vunpack.c.l.b16 %v80
      %v130 = vunpack.c.l.b16 %v81
      %v131 = vunpack.c.l.b16 %v82
      %v132 = vunpack.c.l.b16 %v83
      %v133 = vpack.c.b16 %v118, %v117
      %v134 = vpack.c.b16 %v120, %v119
      %v135 = vpack.c.b16 %v122, %v121
      %v136 = vpack.c.b16 %v124, %v123
      %v137 = vpack.c.b16 %v126, %v125
      %v138 = vpack.c.b16 %v128, %v127
      %v139 = vpack.c.b16 %v130, %v129
      %v140 = vpack.c.b16 %v132, %v131
      %149 = vmatprep.subr.bf16.mxu0 0
      %150 = vmatpush1.bf16.msra.mxu0 %v133
      %151 = vmatprep.subr.bf16.mxu0 0
      %152 = vmatpush1.bf16.msra.mxu0 %v134
      %153 = vmatprep.subr.bf16.mxu0 0
      %154 = vmatpush1.bf16.msra.mxu0 %v135
      %155 = vmatprep.subr.bf16.mxu0 0
      %156 = vmatpush1.bf16.msra.mxu0 %v136
      %157 = vmatprep.subr.bf16.mxu0 0
      %158 = vmatpush1.bf16.msra.mxu0 %v137
      %159 = vmatprep.subr.bf16.mxu0 0
      %160 = vmatpush1.bf16.msra.mxu0 %v138
      %161 = vmatprep.subr.bf16.mxu0 0
      %162 = vmatpush1.bf16.msra.mxu0 %v139
      %163 = vmatprep.subr.bf16.mxu0 0
      %164 = vmatpush1.bf16.msra.mxu0 %v140
      %165 = vmatprep.subr.bf16.mxu0 0
      %166 = vmatpush1.bf16.msra.mxu0 0
      %167 = vmatprep.subr.bf16.mxu0 0
      %168 = vmatpush1.bf16.msra.mxu0 0
      %169 = vmatprep.subr.bf16.mxu0 0
      %170 = vmatpush1.bf16.msra.mxu0 0
      %171 = vmatprep.subr.bf16.mxu0 0
      %172 = vmatpush1.bf16.msra.mxu0 0
      %173 = vmatprep.subr.bf16.mxu0 0
      %174 = vmatpush1.bf16.msra.mxu0 0
      %175 = vmatprep.subr.bf16.mxu0 0
      %176 = vmatpush1.bf16.msra.mxu0 0
      %177 = vmatprep.subr.bf16.mxu0 0
      %178 = vmatpush1.bf16.msra.mxu0 0
      %179 = vmatprep.subr.bf16.mxu0 0
      %180 = vmatpush1.bf16.msra.mxu0 0
      %181 = vmatprep.mubr.bf16.mxu0 0
      %182 = vmatmul.mubr.bf16.gmra.mrb[0].mxu0 %v100
      %v183 = vpop.f32.mrb[0].mxu0
      %v184 = vadd.f32 0.0, %v183
      %v185 = vpop.f32.mrb[0].mxu0
      %v186 = vpop.f32.mrb[0].mxu0
      %v187 = vadd.f32 0.0, %v186
      %v188 = vpop.f32.mrb[0].mxu0
      %189 = vdwg.mxu0
      %v190 = vadd.f32 %v96, %v184
      %v191 = vadd.f32 %v97, %v187
      %v192 = vtanh.pop %v190
      %v193 = vtanh.pop %v191
      %v194 = vpack.c.bf16 %v91, %v90
      %195 = vmatprep.subr.bf16.mxu0 0
      %196 = vmatpush1.bf16.msra.mxu0 %v133
      %197 = vmatprep.subr.bf16.mxu0 0
      %198 = vmatpush1.bf16.msra.mxu0 %v134
      %199 = vmatprep.subr.bf16.mxu0 0
      %200 = vmatpush1.bf16.msra.mxu0 %v135
      %201 = vmatprep.subr.bf16.mxu0 0
      %202 = vmatpush1.bf16.msra.mxu0 %v136
      %203 = vmatprep.subr.bf16.mxu0 0
      %204 = vmatpush1.bf16.msra.mxu0 %v137
      %205 = vmatprep.subr.bf16.mxu0 0
      %206 = vmatpush1.bf16.msra.mxu0 %v138
      %207 = vmatprep.subr.bf16.mxu0 0
      %208 = vmatpush1.bf16.msra.mxu0 %v139
      %209 = vmatprep.subr.bf16.mxu0 0
      %210 = vmatpush1.bf16.msra.mxu0 %v140
      %211 = vmatprep.subr.bf16.mxu0 0
      %212 = vmatpush1.bf16.msra.mxu0 0
      %213 = vmatprep.subr.bf16.mxu0 0
      %214 = vmatpush1.bf16.msra.mxu0 0
      %215 = vmatprep.subr.bf16.mxu0 0
      %216 = vmatpush1.bf16.msra.mxu0 0
      %217 = vmatprep.subr.bf16.mxu0 0
      %218 = vmatpush1.bf16.msra.mxu0 0
      %219 = vmatprep.subr.bf16.mxu0 0
      %220 = vmatpush1.bf16.msra.mxu0 0
      %221 = vmatprep.subr.bf16.mxu0 0
      %222 = vmatpush1.bf16.msra.mxu0 0
      %223 = vmatprep.subr.bf16.mxu0 0
      %224 = vmatpush1.bf16.msra.mxu0 0
      %225 = vmatprep.subr.bf16.mxu0 0
      %226 = vmatpush1.bf16.msra.mxu0 0
      %227 = vmatprep.mubr.bf16.mxu0 0
      %228 = vmatmul.mubr.bf16.gmra.mrb[0].mxu0 %v194
      %v229 = vpop.f32.mrb[0].mxu0
      %v230 = vadd.f32 0.0, %v229
      %v231 = vpop.f32.mrb[0].mxu0
      %v232 = vpop.f32.mrb[0].mxu0
      %v233 = vadd.f32 0.0, %v232
      %v234 = vpop.f32.mrb[0].mxu0
      %235 = vdwg.mxu0
      %v236 = vadd.f32 %v98, %v230
      %v237 = vadd.f32 %v99, %v233
      %v238 = vtanh.pop %v236
      %v239 = vtanh.pop %v237
      %s240 = scalar_lea.vmem [#allocation3], 16
      %v241 = vld [vmem:[%s240] sm:$0xf]
      %v242 = vld [vmem:[%s240 + $0x4] sm:$0xf]
      %v243 = vld [vmem:[%s240 + $0x8] sm:$0xf]
      %v244 = vld [vmem:[%s240 + $0xc] sm:$0xf]
      %v245 = vunpack.c.l.bf16 %v241
      %v246 = vunpack.c.l.bf16 %v242
      %v247 = vunpack.c.l.bf16 %v243
      %v248 = vunpack.c.l.bf16 %v244
      %v249 = vpack.c.bf16 %v193, %v192
      %250 = vmatprep.subr.bf16.mxu0 0
      %251 = vmatpush1.bf16.msra.mxu0 %v133
      %252 = vmatprep.subr.bf16.mxu0 0
      %253 = vmatpush1.bf16.msra.mxu0 %v134
      %254 = vmatprep.subr.bf16.mxu0 0
      %255 = vmatpush1.bf16.msra.mxu0 %v135
      %256 = vmatprep.subr.bf16.mxu0 0
      %257 = vmatpush1.bf16.msra.mxu0 %v136
      %258 = vmatprep.subr.bf16.mxu0 0
      %259 = vmatpush1.bf16.msra.mxu0 %v137
      %260 = vmatprep.subr.bf16.mxu0 0
      %261 = vmatpush1.bf16.msra.mxu0 %v138
      %262 = vmatprep.subr.bf16.mxu0 0
      %263 = vmatpush1.bf16.msra.mxu0 %v139
      %264 = vmatprep.subr.bf16.mxu0 0
      %265 = vmatpush1.bf16.msra.mxu0 %v140
      %266 = vmatprep.subr.bf16.mxu0 0
      %267 = vmatpush1.bf16.msra.mxu0 0
      %268 = vmatprep.subr.bf16.mxu0 0
      %269 = vmatpush1.bf16.msra.mxu0 0
      %270 = vmatprep.subr.bf16.mxu0 0
      %271 = vmatpush1.bf16.msra.mxu0 0
      %272 = vmatprep.subr.bf16.mxu0 0
      %273 = vmatpush1.bf16.msra.mxu0 0
      %274 = vmatprep.subr.bf16.mxu0 0
      %275 = vmatpush1.bf16.msra.mxu0 0
      %276 = vmatprep.subr.bf16.mxu0 0
      %277 = vmatpush1.bf16.msra.mxu0 0
      %278 = vmatprep.subr.bf16.mxu0 0
      %279 = vmatpush1.bf16.msra.mxu0 0
      %280 = vmatprep.subr.bf16.mxu0 0
      %281 = vmatpush1.bf16.msra.mxu0 0
      %282 = vmatprep.mubr.bf16.mxu0 0
      %283 = vmatmul.mubr.bf16.gmra.mrb[0].mxu0 %v249
      %v284 = vpop.f32.mrb[0].mxu0
      %v285 = vadd.f32 0.0, %v284
      %v286 = vpop.f32.mrb[0].mxu0
      %v287 = vpop.f32.mrb[0].mxu0
      %v288 = vadd.f32 0.0, %v287
      %v289 = vpop.f32.mrb[0].mxu0
      %290 = vdwg.mxu0
      %v291 = vadd.f32 %v245, %v285
      %v292 = vadd.f32 %v246, %v288
      %v293 = vtanh.pop %v291
      %v294 = vtanh.pop %v292
      %v295 = vpack.c.bf16 %v239, %v238
      %296 = vmatprep.subr.bf16.mxu0 0
      %297 = vmatpush1.bf16.msra.mxu0 %v133
      %298 = vmatprep.subr.bf16.mxu0 0
      %299 = vmatpush1.bf16.msra.mxu0 %v134
      %300 = vmatprep.subr.bf16.mxu0 0
      %301 = vmatpush1.bf16.msra.mxu0 %v135
      %302 = vmatprep.subr.bf16.mxu0 0
      %303 = vmatpush1.bf16.msra.mxu0 %v136
      %304 = vmatprep.subr.bf16.mxu0 0
      %305 = vmatpush1.bf16.msra.mxu0 %v137
      %306 = vmatprep.subr.bf16.mxu0 0
      %307 = vmatpush1.bf16.msra.mxu0 %v138
      %308 = vmatprep.subr.bf16.mxu0 0
      %309 = vmatpush1.bf16.msra.mxu0 %v139
      %310 = vmatprep.subr.bf16.mxu0 0
      %311 = vmatpush1.bf16.msra.mxu0 %v140
      %312 = vmatprep.subr.bf16.mxu0 0
      %313 = vmatpush1.bf16.msra.mxu0 0
      %314 = vmatprep.subr.bf16.mxu0 0
      %315 = vmatpush1.bf16.msra.mxu0 0
      %316 = vmatprep.subr.bf16.mxu0 0
      %317 = vmatpush1.bf16.msra.mxu0 0
      %318 = vmatprep.subr.bf16.mxu0 0
      %319 = vmatpush1.bf16.msra.mxu0 0
      %320 = vmatprep.subr.bf16.mxu0 0
      %321 = vmatpush1.bf16.msra.mxu0 0
      %322 = vmatprep.subr.bf16.mxu0 0
      %323 = vmatpush1.bf16.msra.mxu0 0
      %324 = vmatprep.subr.bf16.mxu0 0
      %325 = vmatpush1.bf16.msra.mxu0 0
      %326 = vmatprep.subr.bf16.mxu0 0
      %327 = vmatpush1.bf16.msra.mxu0 0
      %328 = vmatprep.mubr.bf16.mxu0 0
      %329 = vmatmul.mubr.bf16.gmra.mrb[0].mxu0 %v295
      %v330 = vpop.f32.mrb[0].mxu0
      %v331 = vadd.f32 0.0, %v330
      %v332 = vpop.f32.mrb[0].mxu0
      %v333 = vpop.f32.mrb[0].mxu0
      %v334 = vadd.f32 0.0, %v333
      %v335 = vpop.f32.mrb[0].mxu0
      %336 = vdwg.mxu0
      %v337 = vadd.f32 %v247, %v331
      %v338 = vadd.f32 %v248, %v334
      %v339 = vtanh.pop %v337
      %v340 = vtanh.pop %v338
      %s341 = scalar_lea.vmem [#allocation3], 32
      %v342 = vld [vmem:[%s341] sm:$0xf]
      %v343 = vld [vmem:[%s341 + $0x4] sm:$0xf]
      %v344 = vld [vmem:[%s341 + $0x8] sm:$0xf]
      %v345 = vld [vmem:[%s341 + $0xc] sm:$0xf]
      %v346 = vunpack.c.l.bf16 %v342
      %v347 = vunpack.c.l.bf16 %v343
      %v348 = vunpack.c.l.bf16 %v344
      %v349 = vunpack.c.l.bf16 %v345
      %v350 = vpack.c.bf16 %v294, %v293
      %351 = vmatprep.subr.bf16.mxu0 0
      %352 = vmatpush1.bf16.msra.mxu0 %v133
      %353 = vmatprep.subr.bf16.mxu0 0
      %354 = vmatpush1.bf16.msra.mxu0 %v134
      %355 = vmatprep.subr.bf16.mxu0 0
      %356 = vmatpush1.bf16.msra.mxu0 %v135
      %357 = vmatprep.subr.bf16.mxu0 0
      %358 = vmatpush1.bf16.msra.mxu0 %v136
      %359 = vmatprep.subr.bf16.mxu0 0
      %360 = vmatpush1.bf16.msra.mxu0 %v137
      %361 = vmatprep.subr.bf16.mxu0 0
      %362 = vmatpush1.bf16.msra.mxu0 %v138
      %363 = vmatprep.subr.bf16.mxu0 0
      %364 = vmatpush1.bf16.msra.mxu0 %v139
      %365 = vmatprep.subr.bf16.mxu0 0
      %366 = vmatpush1.bf16.msra.mxu0 %v140
      %367 = vmatprep.subr.bf16.mxu0 0
      %368 = vmatpush1.bf16.msra.mxu0 0
      %369 = vmatprep.subr.bf16.mxu0 0
      %370 = vmatpush1.bf16.msra.mxu0 0
      %371 = vmatprep.subr.bf16.mxu0 0
      %372 = vmatpush1.bf16.msra.mxu0 0
      %373 = vmatprep.subr.bf16.mxu0 0
      %374 = vmatpush1.bf16.msra.mxu0 0
      %375 = vmatprep.subr.bf16.mxu0 0
      %376 = vmatpush1.bf16.msra.mxu0 0
      %377 = vmatprep.subr.bf16.mxu0 0
      %378 = vmatpush1.bf16.msra.mxu0 0
      %379 = vmatprep.subr.bf16.mxu0 0
      %380 = vmatpush1.bf16.msra.mxu0 0
      %381 = vmatprep.subr.bf16.mxu0 0
      %382 = vmatpush1.bf16.msra.mxu0 0
      %383 = vmatprep.mubr.bf16.mxu0 0
      %384 = vmatmul.mubr.bf16.gmra.mrb[0].mxu0 %v350
      %v385 = vpop.f32.mrb[0].mxu0
      %v386 = vadd.f32 0.0, %v385
      %v387 = vpop.f32.mrb[0].mxu0
      %v388 = vpop.f32.mrb[0].mxu0
      %v389 = vadd.f32 0.0, %v388
      %v390 = vpop.f32.mrb[0].mxu0
      %391 = vdwg.mxu0
      %v392 = vadd.f32 %v346, %v386
      %v393 = vadd.f32 %v347, %v389
      %v394 = vtanh.pop %v392
      %v395 = vtanh.pop %v393
      %v396 = vpack.c.bf16 %v340, %v339
      %397 = vmatprep.subr.bf16.mxu0 0
      %398 = vmatpush1.bf16.msra.mxu0 %v133
      %399 = vmatprep.subr.bf16.mxu0 0
      %400 = vmatpush1.bf16.msra.mxu0 %v134
      %401 = vmatprep.subr.bf16.mxu0 0
      %402 = vmatpush1.bf16.msra.mxu0 %v135
      %403 = vmatprep.subr.bf16.mxu0 0
      %404 = vmatpush1.bf16.msra.mxu0 %v136
      %405 = vmatprep.subr.bf16.mxu0 0
      %406 = vmatpush1.bf16.msra.mxu0 %v137
      %407 = vmatprep.subr.bf16.mxu0 0
      %408 = vmatpush1.bf16.msra.mxu0 %v138
      %409 = vmatprep.subr.bf16.mxu0 0
      %410 = vmatpush1.bf16.msra.mxu0 %v139
      %411 = vmatprep.subr.bf16.mxu0 0
      %412 = vmatpush1.bf16.msra.mxu0 %v140
      %413 = vmatprep.subr.bf16.mxu0 0
      %414 = vmatpush1.bf16.msra.mxu0 0
      %415 = vmatprep.subr.bf16.mxu0 0
      %416 = vmatpush1.bf16.msra.mxu0 0
      %417 = vmatprep.subr.bf16.mxu0 0
      %418 = vmatpush1.bf16.msra.mxu0 0
      %419 = vmatprep.subr.bf16.mxu0 0
      %420 = vmatpush1.bf16.msra.mxu0 0
      %421 = vmatprep.subr.bf16.mxu0 0
      %422 = vmatpush1.bf16.msra.mxu0 0
      %423 = vmatprep.subr.bf16.mxu0 0
      %424 = vmatpush1.bf16.msra.mxu0 0
      %425 = vmatprep.subr.bf16.mxu0 0
      %426 = vmatpush1.bf16.msra.mxu0 0
      %427 = vmatprep.subr.bf16.mxu0 0
      %428 = vmatpush1.bf16.msra.mxu0 0
      %429 = vmatprep.mubr.bf16.mxu0 0
      %430 = vmatmul.mubr.bf16.gmra.mrb[0].mxu0 %v396
      %v431 = vpop.f32.mrb[0].mxu0
      %v432 = vadd.f32 0.0, %v431
      %v433 = vpop.f32.mrb[0].mxu0
      %v434 = vpop.f32.mrb[0].mxu0
      %v435 = vadd.f32 0.0, %v434
      %v436 = vpop.f32.mrb[0].mxu0
      %437 = vdwg.mxu0
      %v438 = vadd.f32 %v348, %v432
      %v439 = vadd.f32 %v349, %v435
      %v440 = vtanh.pop %v438
      %v441 = vtanh.pop %v439
      %s442 = scalar_lea.vmem [#allocation3], 48
      %v443 = vld [vmem:[%s442] sm:$0xf]
      %v444 = vld [vmem:[%s442 + $0x4] sm:$0xf]
      %v445 = vld [vmem:[%s442 + $0x8] sm:$0xf]
      %v446 = vld [vmem:[%s442 + $0xc] sm:$0xf]
      %v447 = vunpack.c.l.bf16 %v443
      %v448 = vunpack.c.l.bf16 %v444
      %v449 = vunpack.c.l.bf16 %v445
      %v450 = vunpack.c.l.bf16 %v446
      %v451 = vpack.c.bf16 %v395, %v394
      %452 = vmatprep.subr.bf16.mxu0 0
      %453 = vmatpush1.bf16.msra.mxu0 %v133
      %454 = vmatprep.subr.bf16.mxu0 0
      %455 = vmatpush1.bf16.msra.mxu0 %v134
      %456 = vmatprep.subr.bf16.mxu0 0
      %457 = vmatpush1.bf16.msra.mxu0 %v135
      %458 = vmatprep.subr.bf16.mxu0 0
      %459 = vmatpush1.bf16.msra.mxu0 %v136
      %460 = vmatprep.subr.bf16.mxu0 0
      %461 = vmatpush1.bf16.msra.mxu0 %v137
      %462 = vmatprep.subr.bf16.mxu0 0
      %463 = vmatpush1.bf16.msra.mxu0 %v138
      %464 = vmatprep.subr.bf16.mxu0 0
      %465 = vmatpush1.bf16.msra.mxu0 %v139
      %466 = vmatprep.subr.bf16.mxu0 0
      %467 = vmatpush1.bf16.msra.mxu0 %v140
      %468 = vmatprep.subr.bf16.mxu0 0
      %469 = vmatpush1.bf16.msra.mxu0 0
      %470 = vmatprep.subr.bf16.mxu0 0
      %471 = vmatpush1.bf16.msra.mxu0 0
      %472 = vmatprep.subr.bf16.mxu0 0
      %473 = vmatpush1.bf16.msra.mxu0 0
      %474 = vmatprep.subr.bf16.mxu0 0
      %475 = vmatpush1.bf16.msra.mxu0 0
      %476 = vmatprep.subr.bf16.mxu0 0
      %477 = vmatpush1.bf16.msra.mxu0 0
      %478 = vmatprep.subr.bf16.mxu0 0
      %479 = vmatpush1.bf16.msra.mxu0 0
      %480 = vmatprep.subr.bf16.mxu0 0
      %481 = vmatpush1.bf16.msra.mxu0 0
      %482 = vmatprep.subr.bf16.mxu0 0
      %483 = vmatpush1.bf16.msra.mxu0 0
      %484 = vmatprep.mubr.bf16.mxu0 0
      %485 = vmatmul.mubr.bf16.gmra.mrb[0].mxu0 %v451
      %v486 = vpop.f32.mrb[0].mxu0
      %v487 = vadd.f32 0.0, %v486
      %v488 = vpop.f32.mrb[0].mxu0
      %v489 = vpop.f32.mrb[0].mxu0
      %v490 = vadd.f32 0.0, %v489
      %v491 = vpop.f32.mrb[0].mxu0
      %492 = vdwg.mxu0
      %v493 = vadd.f32 %v447, %v487
      %v494 = vadd.f32 %v448, %v490
      %v495 = vtanh.pop %v493
      %v496 = vtanh.pop %v494
      %v497 = vpack.c.bf16 %v441, %v440
      %498 = vmatprep.subr.bf16.mxu0 0
      %499 = vmatpush1.bf16.msra.mxu0 %v133
      %500 = vmatprep.subr.bf16.mxu0 0
      %501 = vmatpush1.bf16.msra.mxu0 %v134
      %502 = vmatprep.subr.bf16.mxu0 0
      %503 = vmatpush1.bf16.msra.mxu0 %v135
      %504 = vmatprep.subr.bf16.mxu0 0
      %505 = vmatpush1.bf16.msra.mxu0 %v136
      %506 = vmatprep.subr.bf16.mxu0 0
      %507 = vmatpush1.bf16.msra.mxu0 %v137
      %508 = vmatprep.subr.bf16.mxu0 0
      %509 = vmatpush1.bf16.msra.mxu0 %v138
      %510 = vmatprep.subr.bf16.mxu0 0
      %511 = vmatpush1.bf16.msra.mxu0 %v139
      %512 = vmatprep.subr.bf16.mxu0 0
      %513 = vmatpush1.bf16.msra.mxu0 %v140
      %514 = vmatprep.subr.bf16.mxu0 0
      %515 = vmatpush1.bf16.msra.mxu0 0
      %516 = vmatprep.subr.bf16.mxu0 0
      %517 = vmatpush1.bf16.msra.mxu0 0
      %518 = vmatprep.subr.bf16.mxu0 0
      %519 = vmatpush1.bf16.msra.mxu0 0
      %520 = vmatprep.subr.bf16.mxu0 0
      %521 = vmatpush1.bf16.msra.mxu0 0
      %522 = vmatprep.subr.bf16.mxu0 0
      %523 = vmatpush1.bf16.msra.mxu0 0
      %524 = vmatprep.subr.bf16.mxu0 0
      %525 = vmatpush1.bf16.msra.mxu0 0
      %526 = vmatprep.subr.bf16.mxu0 0
      %527 = vmatpush1.bf16.msra.mxu0 0
      %528 = vmatprep.subr.bf16.mxu0 0
      %529 = vmatpush1.bf16.msra.mxu0 0
      %530 = vmatprep.mubr.bf16.mxu0 0
      %531 = vmatmul.mubr.bf16.gmra.mrb[0].mxu0 %v497
      %v532 = vpop.f32.mrb[0].mxu0
      %v533 = vadd.f32 0.0, %v532
      %v534 = vpop.f32.mrb[0].mxu0
      %v535 = vpop.f32.mrb[0].mxu0
      %v536 = vadd.f32 0.0, %v535
      %v537 = vpop.f32.mrb[0].mxu0
      %538 = vdwg.mxu0
      %v539 = vadd.f32 %v449, %v533
      %v540 = vadd.f32 %v450, %v536
      %v541 = vtanh.pop %v539
      %v542 = vtanh.pop %v540
      %s543 = scalar_lea.vmem [#allocation3], 64
      %v544 = vld [vmem:[%s543] sm:$0xf]
      %v545 = vld [vmem:[%s543 + $0x4] sm:$0xf]
      %v546 = vld [vmem:[%s543 + $0x8] sm:$0xf]
      %v547 = vld [vmem:[%s543 + $0xc] sm:$0xf]
      %v548 = vunpack.c.l.bf16 %v544
      %v549 = vunpack.c.l.bf16 %v545
      %v550 = vunpack.c.l.bf16 %v546
      %v551 = vunpack.c.l.bf16 %v547
      %v552 = vpack.c.bf16 %v496, %v495
      %553 = vmatprep.subr.bf16.mxu0 0
      %554 = vmatpush1.bf16.msra.mxu0 %v133
      %555 = vmatprep.subr.bf16.mxu0 0
      %556 = vmatpush1.bf16.msra.mxu0 %v134
      %557 = vmatprep.subr.bf16.mxu0 0
      %558 = vmatpush1.bf16.msra.mxu0 %v135
      %559 = vmatprep.subr.bf16.mxu0 0
      %560 = vmatpush1.bf16.msra.mxu0 %v136
      %561 = vmatprep.subr.bf16.mxu0 0
      %562 = vmatpush1.bf16.msra.mxu0 %v137
      %563 = vmatprep.subr.bf16.mxu0 0
      %564 = vmatpush1.bf16.msra.mxu0 %v138
      %565 = vmatprep.subr.bf16.mxu0 0
      %566 = vmatpush1.bf16.msra.mxu0 %v139
      %567 = vmatprep.subr.bf16.mxu0 0
      %568 = vmatpush1.bf16.msra.mxu0 %v140
      %569 = vmatprep.subr.bf16.mxu0 0
      %570 = vmatpush1.bf16.msra.mxu0 0
      %571 = vmatprep.subr.bf16.mxu0 0
      %572 = vmatpush1.bf16.msra.mxu0 0
      %573 = vmatprep.subr.bf16.mxu0 0
      %574 = vmatpush1.bf16.msra.mxu0 0
      %575 = vmatprep.subr.bf16.mxu0 0
      %576 = vmatpush1.bf16.msra.mxu0 0
      %577 = vmatprep.subr.bf16.mxu0 0
      %578 = vmatpush1.bf16.msra.mxu0 0
      %579 = vmatprep.subr.bf16.mxu0 0
      %580 = vmatpush1.bf16.msra.mxu0 0
      %581 = vmatprep.subr.bf16.mxu0 0
      %582 = vmatpush1.bf16.msra.mxu0 0
      %583 = vmatprep.subr.bf16.mxu0 0
      %584 = vmatpush1.bf16.msra.mxu0 0
      %585 = vmatprep.mubr.bf16.mxu0 0
      %586 = vmatmul.mubr.bf16.gmra.mrb[0].mxu0 %v552
      %v587 = vpop.f32.mrb[0].mxu0
      %v588 = vadd.f32 0.0, %v587
      %v589 = vpop.f32.mrb[0].mxu0
      %v590 = vpop.f32.mrb[0].mxu0
      %v591 = vadd.f32 0.0, %v590
      %v592 = vpop.f32.mrb[0].mxu0
      %593 = vdwg.mxu0
      %v594 = vadd.f32 %v548, %v588
      %v595 = vadd.f32 %v549, %v591
      %v596 = vtanh.pop %v594
      %v597 = vtanh.pop %v595
      %v598 = vpack.c.bf16 %v542, %v541
      %599 = vmatprep.subr.bf16.mxu0 0
      %600 = vmatpush1.bf16.msra.mxu0 %v133
      %601 = vmatprep.subr.bf16.mxu0 0
      %602 = vmatpush1.bf16.msra.mxu0 %v134
      %603 = vmatprep.subr.bf16.mxu0 0
      %604 = vmatpush1.bf16.msra.mxu0 %v135
      %605 = vmatprep.subr.bf16.mxu0 0
      %606 = vmatpush1.bf16.msra.mxu0 %v136
      %607 = vmatprep.subr.bf16.mxu0 0
      %608 = vmatpush1.bf16.msra.mxu0 %v137
      %609 = vmatprep.subr.bf16.mxu0 0
      %610 = vmatpush1.bf16.msra.mxu0 %v138
      %611 = vmatprep.subr.bf16.mxu0 0
      %612 = vmatpush1.bf16.msra.mxu0 %v139
      %613 = vmatprep.subr.bf16.mxu0 0
      %614 = vmatpush1.bf16.msra.mxu0 %v140
      %615 = vmatprep.subr.bf16.mxu0 0
      %616 = vmatpush1.bf16.msra.mxu0 0
      %617 = vmatprep.subr.bf16.mxu0 0
      %618 = vmatpush1.bf16.msra.mxu0 0
      %619 = vmatprep.subr.bf16.mxu0 0
      %620 = vmatpush1.bf16.msra.mxu0 0
      %621 = vmatprep.subr.bf16.mxu0 0
      %622 = vmatpush1.bf16.msra.mxu0 0
      %623 = vmatprep.subr.bf16.mxu0 0
      %624 = vmatpush1.bf16.msra.mxu0 0
      %625 = vmatprep.subr.bf16.mxu0 0
      %626 = vmatpush1.bf16.msra.mxu0 0
      %627 = vmatprep.subr.bf16.mxu0 0
      %628 = vmatpush1.bf16.msra.mxu0 0
      %629 = vmatprep.subr.bf16.mxu0 0
      %630 = vmatpush1.bf16.msra.mxu0 0
      %631 = vmatprep.mubr.bf16.mxu0 0
      %632 = vmatmul.mubr.bf16.gmra.mrb[0].mxu0 %v598
      %v633 = vpop.f32.mrb[0].mxu0
      %v634 = vadd.f32 0.0, %v633
      %v635 = vpop.f32.mrb[0].mxu0
      %v636 = vpop.f32.mrb[0].mxu0
      %v637 = vadd.f32 0.0, %v636
      %v638 = vpop.f32.mrb[0].mxu0
      %639 = vdwg.mxu0
      %v640 = vadd.f32 %v550, %v634
      %v641 = vadd.f32 %v551, %v637
      %v642 = vtanh.pop %v640
      %v643 = vtanh.pop %v641
      %s644 = scalar_lea.vmem [#allocation3], 80
      %v645 = vld [vmem:[%s644] sm:$0xf]
      %v646 = vld [vmem:[%s644 + $0x4] sm:$0xf]
      %v647 = vld [vmem:[%s644 + $0x8] sm:$0xf]
      %v648 = vld [vmem:[%s644 + $0xc] sm:$0xf]
      %v649 = vunpack.c.l.bf16 %v645
      %v650 = vunpack.c.l.bf16 %v646
      %v651 = vunpack.c.l.bf16 %v647
      %v652 = vunpack.c.l.bf16 %v648
      %v653 = vpack.c.bf16 %v597, %v596
      %654 = vmatprep.subr.bf16.mxu0 0
      %655 = vmatpush1.bf16.msra.mxu0 %v133
      %656 = vmatprep.subr.bf16.mxu0 0
      %657 = vmatpush1.bf16.msra.mxu0 %v134
      %658 = vmatprep.subr.bf16.mxu0 0
      %659 = vmatpush1.bf16.msra.mxu0 %v135
      %660 = vmatprep.subr.bf16.mxu0 0
      %661 = vmatpush1.bf16.msra.mxu0 %v136
      %662 = vmatprep.subr.bf16.mxu0 0
      %663 = vmatpush1.bf16.msra.mxu0 %v137
      %664 = vmatprep.subr.bf16.mxu0 0
      %665 = vmatpush1.bf16.msra.mxu0 %v138
      %666 = vmatprep.subr.bf16.mxu0 0
      %667 = vmatpush1.bf16.msra.mxu0 %v139
      %668 = vmatprep.subr.bf16.mxu0 0
      %669 = vmatpush1.bf16.msra.mxu0 %v140
      %670 = vmatprep.subr.bf16.mxu0 0
      %671 = vmatpush1.bf16.msra.mxu0 0
      %672 = vmatprep.subr.bf16.mxu0 0
      %673 = vmatpush1.bf16.msra.mxu0 0
      %674 = vmatprep.subr.bf16.mxu0 0
      %675 = vmatpush1.bf16.msra.mxu0 0
      %676 = vmatprep.subr.bf16.mxu0 0
      %677 = vmatpush1.bf16.msra.mxu0 0
      %678 = vmatprep.subr.bf16.mxu0 0
      %679 = vmatpush1.bf16.msra.mxu0 0
      %680 = vmatprep.subr.bf16.mxu0 0
      %681 = vmatpush1.bf16.msra.mxu0 0
      %682 = vmatprep.subr.bf16.mxu0 0
      %683 = vmatpush1.bf16.msra.mxu0 0
      %684 = vmatprep.subr.bf16.mxu0 0
      %685 = vmatpush1.bf16.msra.mxu0 0
      %686 = vmatprep.mubr.bf16.mxu0 0
      %687 = vmatmul.mubr.bf16.gmra.mrb[0].mxu0 %v653
      %v688 = vpop.f32.mrb[0].mxu0
      %v689 = vadd.f32 0.0, %v688
      %v690 = vpop.f32.mrb[0].mxu0
      %v691 = vpop.f32.mrb[0].mxu0
      %v692 = vadd.f32 0.0, %v691
      %v693 = vpop.f32.mrb[0].mxu0
      %694 = vdwg.mxu0
      %v695 = vadd.f32 %v649, %v689
      %v696 = vadd.f32 %v650, %v692
      %v697 = vtanh.pop %v695
      %v698 = vtanh.pop %v696
      %v699 = vpack.c.bf16 %v643, %v642
      %700 = vmatprep.subr.bf16.mxu0 0
      %701 = vmatpush1.bf16.msra.mxu0 %v133
      %702 = vmatprep.subr.bf16.mxu0 0
      %703 = vmatpush1.bf16.msra.mxu0 %v134
      %704 = vmatprep.subr.bf16.mxu0 0
      %705 = vmatpush1.bf16.msra.mxu0 %v135
      %706 = vmatprep.subr.bf16.mxu0 0
      %707 = vmatpush1.bf16.msra.mxu0 %v136
      %708 = vmatprep.subr.bf16.mxu0 0
      %709 = vmatpush1.bf16.msra.mxu0 %v137
      %710 = vmatprep.subr.bf16.mxu0 0
      %711 = vmatpush1.bf16.msra.mxu0 %v138
      %712 = vmatprep.subr.bf16.mxu0 0
      %713 = vmatpush1.bf16.msra.mxu0 %v139
      %714 = vmatprep.subr.bf16.mxu0 0
      %715 = vmatpush1.bf16.msra.mxu0 %v140
      %716 = vmatprep.subr.bf16.mxu0 0
      %717 = vmatpush1.bf16.msra.mxu0 0
      %718 = vmatprep.subr.bf16.mxu0 0
      %719 = vmatpush1.bf16.msra.mxu0 0
      %720 = vmatprep.subr.bf16.mxu0 0
      %721 = vmatpush1.bf16.msra.mxu0 0
      %722 = vmatprep.subr.bf16.mxu0 0
      %723 = vmatpush1.bf16.msra.mxu0 0
      %724 = vmatprep.subr.bf16.mxu0 0
      %725 = vmatpush1.bf16.msra.mxu0 0
      %726 = vmatprep.subr.bf16.mxu0 0
      %727 = vmatpush1.bf16.msra.mxu0 0
      %728 = vmatprep.subr.bf16.mxu0 0
      %729 = vmatpush1.bf16.msra.mxu0 0
      %730 = vmatprep.subr.bf16.mxu0 0
      %731 = vmatpush1.bf16.msra.mxu0 0
      %732 = vmatprep.mubr.bf16.mxu0 0
      %733 = vmatmul.mubr.bf16.gmra.mrb[0].mxu0 %v699
      %v734 = vpop.f32.mrb[0].mxu0
      %v735 = vadd.f32 0.0, %v734
      %v736 = vpop.f32.mrb[0].mxu0
      %v737 = vpop.f32.mrb[0].mxu0
      %v738 = vadd.f32 0.0, %v737
      %v739 = vpop.f32.mrb[0].mxu0
      %740 = vdwg.mxu0
      %v741 = vadd.f32 %v651, %v735
      %v742 = vadd.f32 %v652, %v738
      %v743 = vtanh.pop %v741
      %v744 = vtanh.pop %v742
      %s745 = scalar_lea.vmem [#allocation3], 96
      %v746 = vld [vmem:[%s745] sm:$0xf]
      %v747 = vld [vmem:[%s745 + $0x4] sm:$0xf]
      %v748 = vld [vmem:[%s745 + $0x8] sm:$0xf]
      %v749 = vld [vmem:[%s745 + $0xc] sm:$0xf]
      %v750 = vunpack.c.l.bf16 %v746
      %v751 = vunpack.c.l.bf16 %v747
      %v752 = vunpack.c.l.bf16 %v748
      %v753 = vunpack.c.l.bf16 %v749
      %v754 = vpack.c.bf16 %v698, %v697
      %755 = vmatprep.subr.bf16.mxu0 0
      %756 = vmatpush1.bf16.msra.mxu0 %v133
      %757 = vmatprep.subr.bf16.mxu0 0
      %758 = vmatpush1.bf16.msra.mxu0 %v134
      %759 = vmatprep.subr.bf16.mxu0 0
      %760 = vmatpush1.bf16.msra.mxu0 %v135
      %761 = vmatprep.subr.bf16.mxu0 0
      %762 = vmatpush1.bf16.msra.mxu0 %v136
      %763 = vmatprep.subr.bf16.mxu0 0
      %764 = vmatpush1.bf16.msra.mxu0 %v137
      %765 = vmatprep.subr.bf16.mxu0 0
      %766 = vmatpush1.bf16.msra.mxu0 %v138
      %767 = vmatprep.subr.bf16.mxu0 0
      %768 = vmatpush1.bf16.msra.mxu0 %v139
      %769 = vmatprep.subr.bf16.mxu0 0
      %770 = vmatpush1.bf16.msra.mxu0 %v140
      %771 = vmatprep.subr.bf16.mxu0 0
      %772 = vmatpush1.bf16.msra.mxu0 0
      %773 = vmatprep.subr.bf16.mxu0 0
      %774 = vmatpush1.bf16.msra.mxu0 0
      %775 = vmatprep.subr.bf16.mxu0 0
      %776 = vmatpush1.bf16.msra.mxu0 0
      %777 = vmatprep.subr.bf16.mxu0 0
      %778 = vmatpush1.bf16.msra.mxu0 0
      %779 = vmatprep.subr.bf16.mxu0 0
      %780 = vmatpush1.bf16.msra.mxu0 0
      %781 = vmatprep.subr.bf16.mxu0 0
      %782 = vmatpush1.bf16.msra.mxu0 0
      %783 = vmatprep.subr.bf16.mxu0 0
      %784 = vmatpush1.bf16.msra.mxu0 0
      %785 = vmatprep.subr.bf16.mxu0 0
      %786 = vmatpush1.bf16.msra.mxu0 0
      %787 = vmatprep.mubr.bf16.mxu0 0
      %788 = vmatmul.mubr.bf16.gmra.mrb[0].mxu0 %v754
      %v789 = vpop.f32.mrb[0].mxu0
      %v790 = vadd.f32 0.0, %v789
      %v791 = vpop.f32.mrb[0].mxu0
      %v792 = vpop.f32.mrb[0].mxu0
      %v793 = vadd.f32 0.0, %v792
      %v794 = vpop.f32.mrb[0].mxu0
      %795 = vdwg.mxu0
      %v796 = vadd.f32 %v750, %v790
      %v797 = vadd.f32 %v751, %v793
      %v798 = vtanh.pop %v796
      %v799 = vtanh.pop %v797
      %v800 = vpack.c.bf16 %v744, %v743
      %801 = vmatprep.subr.bf16.mxu0 0
      %802 = vmatpush1.bf16.msra.mxu0 %v133
      %803 = vmatprep.subr.bf16.mxu0 0
      %804 = vmatpush1.bf16.msra.mxu0 %v134
      %805 = vmatprep.subr.bf16.mxu0 0
      %806 = vmatpush1.bf16.msra.mxu0 %v135
      %807 = vmatprep.subr.bf16.mxu0 0
      %808 = vmatpush1.bf16.msra.mxu0 %v136
      %809 = vmatprep.subr.bf16.mxu0 0
      %810 = vmatpush1.bf16.msra.mxu0 %v137
      %811 = vmatprep.subr.bf16.mxu0 0
      %812 = vmatpush1.bf16.msra.mxu0 %v138
      %813 = vmatprep.subr.bf16.mxu0 0
      %814 = vmatpush1.bf16.msra.mxu0 %v139
      %815 = vmatprep.subr.bf16.mxu0 0
      %816 = vmatpush1.bf16.msra.mxu0 %v140
      %817 = vmatprep.subr.bf16.mxu0 0
      %818 = vmatpush1.bf16.msra.mxu0 0
      %819 = vmatprep.subr.bf16.mxu0 0
      %820 = vmatpush1.bf16.msra.mxu0 0
      %821 = vmatprep.subr.bf16.mxu0 0
      %822 = vmatpush1.bf16.msra.mxu0 0
      %823 = vmatprep.subr.bf16.mxu0 0
      %824 = vmatpush1.bf16.msra.mxu0 0
      %825 = vmatprep.subr.bf16.mxu0 0
      %826 = vmatpush1.bf16.msra.mxu0 0
      %827 = vmatprep.subr.bf16.mxu0 0
      %828 = vmatpush1.bf16.msra.mxu0 0
      %829 = vmatprep.subr.bf16.mxu0 0
      %830 = vmatpush1.bf16.msra.mxu0 0
      %831 = vmatprep.subr.bf16.mxu0 0
      %832 = vmatpush1.bf16.msra.mxu0 0
      %833 = vmatprep.mubr.bf16.mxu0 0
      %834 = vmatmul.mubr.bf16.gmra.mrb[0].mxu0 %v800
      %v835 = vpop.f32.mrb[0].mxu0
      %v836 = vadd.f32 0.0, %v835
      %v837 = vpop.f32.mrb[0].mxu0
      %v838 = vpop.f32.mrb[0].mxu0
      %v839 = vadd.f32 0.0, %v838
      %v840 = vpop.f32.mrb[0].mxu0
      %841 = vdwg.mxu0
      %v842 = vadd.f32 %v752, %v836
      %v843 = vadd.f32 %v753, %v839
      %v844 = vtanh.pop %v842
      %v845 = vtanh.pop %v843
      %s846 = scalar_lea.vmem [#allocation3], 112
      %v847 = vld [vmem:[%s846] sm:$0xf]
      %v848 = vld [vmem:[%s846 + $0x4] sm:$0xf]
      %v849 = vld [vmem:[%s846 + $0x8] sm:$0xf]
      %v850 = vld [vmem:[%s846 + $0xc] sm:$0xf]
      %v851 = vunpack.c.l.bf16 %v847
      %v852 = vunpack.c.l.bf16 %v848
      %v853 = vunpack.c.l.bf16 %v849
      %v854 = vunpack.c.l.bf16 %v850
      %v855 = vpack.c.bf16 %v799, %v798
      %856 = vmatprep.subr.bf16.mxu0 0
      %857 = vmatpush1.bf16.msra.mxu0 %v133
      %858 = vmatprep.subr.bf16.mxu0 0
      %859 = vmatpush1.bf16.msra.mxu0 %v134
      %860 = vmatprep.subr.bf16.mxu0 0
      %861 = vmatpush1.bf16.msra.mxu0 %v135
      %862 = vmatprep.subr.bf16.mxu0 0
      %863 = vmatpush1.bf16.msra.mxu0 %v136
      %864 = vmatprep.subr.bf16.mxu0 0
      %865 = vmatpush1.bf16.msra.mxu0 %v137
      %866 = vmatprep.subr.bf16.mxu0 0
      %867 = vmatpush1.bf16.msra.mxu0 %v138
      %868 = vmatprep.subr.bf16.mxu0 0
      %869 = vmatpush1.bf16.msra.mxu0 %v139
      %870 = vmatprep.subr.bf16.mxu0 0
      %871 = vmatpush1.bf16.msra.mxu0 %v140
      %872 = vmatprep.subr.bf16.mxu0 0
      %873 = vmatpush1.bf16.msra.mxu0 0
      %874 = vmatprep.subr.bf16.mxu0 0
      %875 = vmatpush1.bf16.msra.mxu0 0
      %876 = vmatprep.subr.bf16.mxu0 0
      %877 = vmatpush1.bf16.msra.mxu0 0
      %878 = vmatprep.subr.bf16.mxu0 0
      %879 = vmatpush1.bf16.msra.mxu0 0
      %880 = vmatprep.subr.bf16.mxu0 0
      %881 = vmatpush1.bf16.msra.mxu0 0
      %882 = vmatprep.subr.bf16.mxu0 0
      %883 = vmatpush1.bf16.msra.mxu0 0
      %884 = vmatprep.subr.bf16.mxu0 0
      %885 = vmatpush1.bf16.msra.mxu0 0
      %886 = vmatprep.subr.bf16.mxu0 0
      %887 = vmatpush1.bf16.msra.mxu0 0
      %888 = vmatprep.mubr.bf16.mxu0 0
      %889 = vmatmul.mubr.bf16.gmra.mrb[0].mxu0 %v855
      %v890 = vpop.f32.mrb[0].mxu0
      %v891 = vadd.f32 0.0, %v890
      %v892 = vpop.f32.mrb[0].mxu0
      %v893 = vpop.f32.mrb[0].mxu0
      %v894 = vadd.f32 0.0, %v893
      %v895 = vpop.f32.mrb[0].mxu0
      %896 = vdwg.mxu0
      %v897 = vadd.f32 %v851, %v891
      %v898 = vadd.f32 %v852, %v894
      %v899 = vtanh.pop %v897
      %v900 = vtanh.pop %v898
      %v901 = vpack.c.bf16 %v845, %v844
      %902 = vmatprep.subr.bf16.mxu0 0
      %903 = vmatpush1.bf16.msra.mxu0 %v133
      %904 = vmatprep.subr.bf16.mxu0 0
      %905 = vmatpush1.bf16.msra.mxu0 %v134
      %906 = vmatprep.subr.bf16.mxu0 0
      %907 = vmatpush1.bf16.msra.mxu0 %v135
      %908 = vmatprep.subr.bf16.mxu0 0
      %909 = vmatpush1.bf16.msra.mxu0 %v136
      %910 = vmatprep.subr.bf16.mxu0 0
      %911 = vmatpush1.bf16.msra.mxu0 %v137
      %912 = vmatprep.subr.bf16.mxu0 0
      %913 = vmatpush1.bf16.msra.mxu0 %v138
      %914 = vmatprep.subr.bf16.mxu0 0
      %915 = vmatpush1.bf16.msra.mxu0 %v139
      %916 = vmatprep.subr.bf16.mxu0 0
      %917 = vmatpush1.bf16.msra.mxu0 %v140
      %918 = vmatprep.subr.bf16.mxu0 0
      %919 = vmatpush1.bf16.msra.mxu0 0
      %920 = vmatprep.subr.bf16.mxu0 0
      %921 = vmatpush1.bf16.msra.mxu0 0
      %922 = vmatprep.subr.bf16.mxu0 0
      %923 = vmatpush1.bf16.msra.mxu0 0
      %924 = vmatprep.subr.bf16.mxu0 0
      %925 = vmatpush1.bf16.msra.mxu0 0
      %926 = vmatprep.subr.bf16.mxu0 0
      %927 = vmatpush1.bf16.msra.mxu0 0
      %928 = vmatprep.subr.bf16.mxu0 0
      %929 = vmatpush1.bf16.msra.mxu0 0
      %930 = vmatprep.subr.bf16.mxu0 0
      %931 = vmatpush1.bf16.msra.mxu0 0
      %932 = vmatprep.subr.bf16.mxu0 0
      %933 = vmatpush1.bf16.msra.mxu0 0
      %934 = vmatprep.mubr.bf16.mxu0 0
      %935 = vmatmul.mubr.bf16.gmra.mrb[0].mxu0 %v901
      %v936 = vpop.f32.mrb[0].mxu0
      %v937 = vadd.f32 0.0, %v936
      %v938 = vpop.f32.mrb[0].mxu0
      %v939 = vpop.f32.mrb[0].mxu0
      %v940 = vadd.f32 0.0, %v939
      %v941 = vpop.f32.mrb[0].mxu0
      %942 = vdwg.mxu0
      %v943 = vadd.f32 %v853, %v937
      %v944 = vadd.f32 %v854, %v940
      %v945 = vtanh.pop %v943
      %v946 = vtanh.pop %v944
      %947 = vst [vmem:[#allocation2] sm:$0xff] %v899
      %948 = vst [vmem:[#allocation2 + $0x8] sm:$0xff] %v900
      %949 = vst [vmem:[%s89] sm:$0xff] %v945
      %950 = vst [vmem:[%s89 + $0x8] sm:$0xff] %v946
      %v951 = vpack.c.bf16 %v900, %v899
      %v952 = vld [vmem:[#allocation8] sm:$0xf]
      %v953 = vld [vmem:[#allocation8 + $0x4] sm:$0xf]
      %v954 = vld [vmem:[#allocation8 + $0x8] sm:$0xf]
      %v955 = vld [vmem:[#allocation8 + $0xc] sm:$0xf]
      %v956 = vld [vmem:[#allocation8 + $0x10] sm:$0xf]
      %v957 = vld [vmem:[#allocation8 + $0x14] sm:$0xf]
      %v958 = vld [vmem:[#allocation8 + $0x18] sm:$0xf]
      %v959 = vld [vmem:[#allocation8 + $0x1c] sm:$0xf]
      %v960 = vld [vmem:[#allocation8 + $0x20] sm:$0xf]
      %v961 = vld [vmem:[#allocation8 + $0x24] sm:$0xf]
      %v962 = vld [vmem:[#allocation8 + $0x28] sm:$0xf]
      %v963 = vld [vmem:[#allocation8 + $0x2c] sm:$0xf]
      %v964 = vld [vmem:[#allocation8 + $0x30] sm:$0xf]
      %v965 = vld [vmem:[#allocation8 + $0x34] sm:$0xf]
      %v966 = vld [vmem:[#allocation8 + $0x38] sm:$0xf]
      %v967 = vld [vmem:[#allocation8 + $0x3c] sm:$0xf]
      %v968 = vld [vmem:[%s3] sm:$0x1]
      %v970 = vlaneseq
      %v971 = vshrl.u32 %v970, 7
      %v972 = vsub.s32 0, %v971
      %v973 = vrot.slane %v968, %v972
      %v991 = vunpack.c.l.b16 %v952
      %v992 = vunpack.c.l.b16 %v953
      %v993 = vunpack.c.l.b16 %v954
      %v994 = vunpack.c.l.b16 %v955
      %v995 = vunpack.c.l.b16 %v956
      %v996 = vunpack.c.l.b16 %v957
      %v997 = vunpack.c.l.b16 %v958
      %v998 = vunpack.c.l.b16 %v959
      %v999 = vunpack.c.l.b16 %v960
      %v1000 = vunpack.c.l.b16 %v961
      %v1001 = vunpack.c.l.b16 %v962
      %v1002 = vunpack.c.l.b16 %v963
      %v1003 = vunpack.c.l.b16 %v964
      %v1004 = vunpack.c.l.b16 %v965
      %v1005 = vunpack.c.l.b16 %v966
      %v1006 = vunpack.c.l.b16 %v967
      %v1007 = vpack.c.b16 %v992, %v991
      %v1008 = vpack.c.b16 %v994, %v993
      %v1009 = vpack.c.b16 %v996, %v995
      %v1010 = vpack.c.b16 %v998, %v997
      %v1011 = vpack.c.b16 %v1000, %v999
      %v1012 = vpack.c.b16 %v1002, %v1001
      %v1013 = vpack.c.b16 %v1004, %v1003
      %v1014 = vpack.c.b16 %v1006, %v1005
      %1023 = vmatprep.subr.bf16.mxu0 0
      %1024 = vmatpush1.bf16.msra.mxu0 %v1007
      %1025 = vmatprep.subr.bf16.mxu0 0
      %1026 = vmatpush1.bf16.msra.mxu0 %v1008
      %1027 = vmatprep.subr.bf16.mxu0 0
      %1028 = vmatpush1.bf16.msra.mxu0 %v1009
      %1029 = vmatprep.subr.bf16.mxu0 0
      %1030 = vmatpush1.bf16.msra.mxu0 %v1010
      %1031 = vmatprep.subr.bf16.mxu0 0
      %1032 = vmatpush1.bf16.msra.mxu0 %v1011
      %1033 = vmatprep.subr.bf16.mxu0 0
      %1034 = vmatpush1.bf16.msra.mxu0 %v1012
      %1035 = vmatprep.subr.bf16.mxu0 0
      %1036 = vmatpush1.bf16.msra.mxu0 %v1013
      %1037 = vmatprep.subr.bf16.mxu0 0
      %1038 = vmatpush1.bf16.msra.mxu0 %v1014
      %1039 = vmatprep.subr.bf16.mxu0 0
      %1040 = vmatpush1.bf16.msra.mxu0 0
      %1041 = vmatprep.subr.bf16.mxu0 0
      %1042 = vmatpush1.bf16.msra.mxu0 0
      %1043 = vmatprep.subr.bf16.mxu0 0
      %1044 = vmatpush1.bf16.msra.mxu0 0
      %1045 = vmatprep.subr.bf16.mxu0 0
      %1046 = vmatpush1.bf16.msra.mxu0 0
      %1047 = vmatprep.subr.bf16.mxu0 0
      %1048 = vmatpush1.bf16.msra.mxu0 0
      %1049 = vmatprep.subr.bf16.mxu0 0
      %1050 = vmatpush1.bf16.msra.mxu0 0
      %1051 = vmatprep.subr.bf16.mxu0 0
      %1052 = vmatpush1.bf16.msra.mxu0 0
      %1053 = vmatprep.subr.bf16.mxu0 0
      %1054 = vmatpush1.bf16.msra.mxu0 0
      %1055 = vmatprep.mubr.bf16.mxu0 0
      %1056 = vmatmul.mubr.bf16.gmra.mrb[0].mxu0 %v951
      %v1057 = vpop.f32.mrb[0].mxu0
      %v1058 = vadd.f32 %v973, %v1057
      %v1059 = vpop.f32.mrb[0].mxu0
      %v1060 = vpop.f32.mrb[0].mxu0
      %v1061 = vadd.f32 %v973, %v1060
      %v1062 = vpop.f32.mrb[0].mxu0
      %1063 = vdwg.mxu0
      %1064 = vst [vmem:[#allocation9] sm:$0xff] %v1058
      %1065 = vst [vmem:[#allocation9 + $0x8] sm:$0xff] %v1061
      %v1066 = vpack.c.bf16 %v946, %v945
      %v1067 = vld [vmem:[#allocation8] sm:$0xf]
      %v1068 = vld [vmem:[#allocation8 + $0x4] sm:$0xf]
      %v1069 = vld [vmem:[#allocation8 + $0x8] sm:$0xf]
      %v1070 = vld [vmem:[#allocation8 + $0xc] sm:$0xf]
      %v1071 = vld [vmem:[#allocation8 + $0x10] sm:$0xf]
      %v1072 = vld [vmem:[#allocation8 + $0x14] sm:$0xf]
      %v1073 = vld [vmem:[#allocation8 + $0x18] sm:$0xf]
      %v1074 = vld [vmem:[#allocation8 + $0x1c] sm:$0xf]
      %v1075 = vld [vmem:[#allocation8 + $0x20] sm:$0xf]
      %v1076 = vld [vmem:[#allocation8 + $0x24] sm:$0xf]
      %v1077 = vld [vmem:[#allocation8 + $0x28] sm:$0xf]
      %v1078 = vld [vmem:[#allocation8 + $0x2c] sm:$0xf]
      %v1079 = vld [vmem:[#allocation8 + $0x30] sm:$0xf]
      %v1080 = vld [vmem:[#allocation8 + $0x34] sm:$0xf]
      %v1081 = vld [vmem:[#allocation8 + $0x38] sm:$0xf]
      %v1082 = vld [vmem:[#allocation8 + $0x3c] sm:$0xf]
      %v1083 = vld [vmem:[%s3] sm:$0x1]
      %v1085 = vlaneseq
      %v1086 = vshrl.u32 %v1085, 7
      %v1087 = vsub.s32 0, %v1086
      %v1088 = vrot.slane %v1083, %v1087
      %v1106 = vunpack.c.l.b16 %v1067
      %v1107 = vunpack.c.l.b16 %v1068
      %v1108 = vunpack.c.l.b16 %v1069
      %v1109 = vunpack.c.l.b16 %v1070
      %v1110 = vunpack.c.l.b16 %v1071
      %v1111 = vunpack.c.l.b16 %v1072
      %v1112 = vunpack.c.l.b16 %v1073
      %v1113 = vunpack.c.l.b16 %v1074
      %v1114 = vunpack.c.l.b16 %v1075
      %v1115 = vunpack.c.l.b16 %v1076
      %v1116 = vunpack.c.l.b16 %v1077
      %v1117 = vunpack.c.l.b16 %v1078
      %v1118 = vunpack.c.l.b16 %v1079
      %v1119 = vunpack.c.l.b16 %v1080
      %v1120 = vunpack.c.l.b16 %v1081
      %v1121 = vunpack.c.l.b16 %v1082
      %v1122 = vpack.c.b16 %v1107, %v1106
      %v1123 = vpack.c.b16 %v1109, %v1108
      %v1124 = vpack.c.b16 %v1111, %v1110
      %v1125 = vpack.c.b16 %v1113, %v1112
      %v1126 = vpack.c.b16 %v1115, %v1114
      %v1127 = vpack.c.b16 %v1117, %v1116
      %v1128 = vpack.c.b16 %v1119, %v1118
      %v1129 = vpack.c.b16 %v1121, %v1120
      %1138 = vmatprep.subr.bf16.mxu0 0
      %1139 = vmatpush1.bf16.msra.mxu0 %v1122
      %1140 = vmatprep.subr.bf16.mxu0 0
      %1141 = vmatpush1.bf16.msra.mxu0 %v1123
      %1142 = vmatprep.subr.bf16.mxu0 0
      %1143 = vmatpush1.bf16.msra.mxu0 %v1124
      %1144 = vmatprep.subr.bf16.mxu0 0
      %1145 = vmatpush1.bf16.msra.mxu0 %v1125
      %1146 = vmatprep.subr.bf16.mxu0 0
      %1147 = vmatpush1.bf16.msra.mxu0 %v1126
      %1148 = vmatprep.subr.bf16.mxu0 0
      %1149 = vmatpush1.bf16.msra.mxu0 %v1127
      %1150 = vmatprep.subr.bf16.mxu0 0
      %1151 = vmatpush1.bf16.msra.mxu0 %v1128
      %1152 = vmatprep.subr.bf16.mxu0 0
      %1153 = vmatpush1.bf16.msra.mxu0 %v1129
      %1154 = vmatprep.subr.bf16.mxu0 0
      %1155 = vmatpush1.bf16.msra.mxu0 0
      %1156 = vmatprep.subr.bf16.mxu0 0
      %1157 = vmatpush1.bf16.msra.mxu0 0
      %1158 = vmatprep.subr.bf16.mxu0 0
      %1159 = vmatpush1.bf16.msra.mxu0 0
      %1160 = vmatprep.subr.bf16.mxu0 0
      %1161 = vmatpush1.bf16.msra.mxu0 0
      %1162 = vmatprep.subr.bf16.mxu0 0
      %1163 = vmatpush1.bf16.msra.mxu0 0
      %1164 = vmatprep.subr.bf16.mxu0 0
      %1165 = vmatpush1.bf16.msra.mxu0 0
      %1166 = vmatprep.subr.bf16.mxu0 0
      %1167 = vmatpush1.bf16.msra.mxu0 0
      %1168 = vmatprep.subr.bf16.mxu0 0
      %1169 = vmatpush1.bf16.msra.mxu0 0
      %1170 = vmatprep.mubr.bf16.mxu0 0
      %1171 = vmatmul.mubr.bf16.gmra.mrb[0].mxu0 %v1066
      %v1172 = vpop.f32.mrb[0].mxu0
      %v1173 = vadd.f32 %v1088, %v1172
      %v1174 = vpop.f32.mrb[0].mxu0
      %v1175 = vpop.f32.mrb[0].mxu0
      %v1176 = vadd.f32 %v1088, %v1175
      %v1177 = vpop.f32.mrb[0].mxu0
      %1178 = vdwg.mxu0
      %1179 = vst [vmem:[#allocation9 + $0x10] sm:$0xff] %v1173
      %1180 = vst [vmem:[#allocation9 + $0x18] sm:$0xff] %v1176
    $region37: #{tpu_custom_call.1} parent=1 // pred_fallthru
      _
    // Predicated region
    $region38: #{tpu_custom_call.1} parent=1 // pred_check
      _
    $region39: #{tpu_custom_call.1} parent=1 // pred_check_branch
      %1182 = sbr.rel (0) target = $region41
    $region40: #{tpu_custom_call.1} parent=1 // pred_region
      %s1184 = ssub.s32 512, 512
      %1185 = vsyncadd [#allocation5], %s1184
      %s1186 = sshll.u32 [#allocation9], 4
      %s1187 = int_to_ptr.vmem [resolvable:$true] %s1186
      %1192 = dma.vmem_to_hbm [thread:$0]  %s1187, 512, %s4, [#allocation5], 128, 128, 8
    $region41: #{tpu_custom_call.1} parent=1 // pred_fallthru
      _
    // Predicated region
    $region42: #{tpu_custom_call.1} parent=1 // pred_check
      _
    $region43: #{tpu_custom_call.1} parent=1 // pred_check_branch
      %1194 = sbr.rel (0) target = $region45
    $region44: #{tpu_custom_call.1} parent=1 // pred_region
      %1195 = dma.done [#allocation5], 512
    $region45: #{tpu_custom_call.1} parent=1 // pred_fallthru
      _
    %1196 = vsyncpa [#allocation4], 1
    %1197 = vsyncpa [#allocation7], 1
    %1198 = vsyncpa [#allocation5], 1

</llo_original>
